<compile_context>
chip_gen: v5e
topology: v5e:2x2
jax: 0.10.0
libtpu: 0.0.40
codegen_flags: <defaults>
</compile_context>

<pallas_src>
import functools
import math

import jax
import jax.numpy as jnp
from jax.experimental import pallas as pl
from jax.experimental.pallas import tpu as pltpu  # noqa: F401  (TPU-specific tuning hooks)

SEQ_LEN = 8
OCTAVE = 12
NUM_OCTAVES = 4
LAST_DIM = 3
HIDDEN = 32
BATCH = 2
NOTE_IN = NUM_OCTAVES * LAST_DIM      # 12
NOTE_IN_PAD = 16                      # padded to a multiple of 8 sublanes


# ---------------------------------------------------------------------------
# Fused kernel: note LSTM -> time LSTM -> dense -> sigmoid, single launch.
# Gate order inside the kernel is [i, f, o, g]; the i/f/o weight columns are
# pre-scaled by 0.5 so sigmoid(x) = 0.5*tanh(x/2)+0.5 becomes one full-vreg tanh.
# ---------------------------------------------------------------------------
def _lstm_cell_step(gates, c, hidden):
    """gates: (N, 4H) with gate order [i, f, o, g]; i/f/o columns pre-scaled by 0.5.
    Returns (h_new, c_new)."""
    H = hidden
    t_all = jnp.tanh(gates)                     # ONE full-128-lane EUP tanh
    sig = t_all[:, : 3 * H] * 0.5 + 0.5         # == sigmoid of the un-scaled i|f|o gates
    i_g = sig[:, 0 * H:1 * H]
    f_g = sig[:, 1 * H:2 * H]
    o_g = sig[:, 2 * H:3 * H]
    g_g = t_all[:, 3 * H:]
    c_new = f_g * c + i_g * g_g
    h_new = o_g * jnp.tanh(c_new)
    return h_new, c_new


def _fused_discriminator_kernel(
    x_ref,       # (OCTAVE * B*SEQ_LEN, NOTE_IN_PAD)   note rows, octave-major, rows s*B+b
    w_ref,       # (120, 4H)                            packed weight slab (see wrapper)
    out_ref,     # (B, 1)
    *, batch, seq_len, octave, hidden, in_pad,
):
    H = hidden
    NBS = batch * seq_len

    # Static, 8-sublane-aligned row offsets into the packed slab.
    r_nwih = 0
    r_nwhh = r_nwih + in_pad     # note W_ih^T ends
    r_twih = r_nwhh + H          # note W_hh^T ends
    r_twhh = r_twih + H          # time W_ih^T ends
    r_misc = r_twhh + H          # time W_hh^T ends; misc 8-row block follows

    note_wih = w_ref[r_nwih:r_nwhh, :]                 # (in_pad, 4H)
    note_whh = w_ref[r_nwhh:r_twih, :]                 # (H, 4H)
    time_wih = w_ref[r_twih:r_twhh, :]                 # (H, 4H)
    time_whh = w_ref[r_twhh:r_misc, :]                 # (H, 4H)
    note_b = w_ref[r_misc + 0:r_misc + 1, :]           # (1, 4H)
    time_b = w_ref[r_misc + 1:r_misc + 2, :]           # (1, 4H)
    dense_w = w_ref[r_misc + 2:r_misc + 3, 0:H]        # (1, H)
    dense_b = w_ref[r_misc + 3:r_misc + 4, 0:1]        # (1, 1)

    # ---------------- note LSTM (seq axis = OCTAVE, batch = B*SEQ_LEN) ----------------
    # Hoisted input projection: one GEMM covering every (octave-step, row) pair.
    gx = (
        jnp.dot(x_ref[...], note_wih, preferred_element_type=jnp.float32)
        + note_b
    )                                                  # (OCTAVE*NBS, 4H)

    h = jnp.zeros((NBS, H), jnp.float32)
    c = jnp.zeros((NBS, H), jnp.float32)
    for t in range(octave):                            # fully unrolled, static aligned slices
        gates = gx[t * NBS:(t + 1) * NBS, :] + jnp.dot(
            h, note_whh, preferred_element_type=jnp.float32)
        h, c = _lstm_cell_step(gates, c, H)
    # h: (B*SEQ_LEN, H), rows ordered s*B + b (time-major for the time LSTM).

    # ---------------- time LSTM (seq axis = SEQ_LEN, batch = B) ----------------
    gxt = (
        jnp.dot(h, time_wih, preferred_element_type=jnp.float32)
        + time_b
    )                                                  # (B*SEQ_LEN, 4H)

    h2 = jnp.zeros((batch, H), jnp.float32)
    c2 = jnp.zeros((batch, H), jnp.float32)
    for s in range(seq_len):
        # Contiguous 2-row slice (rows s*B .. s*B+B-1): single-tile sublane select.
        gates = gxt[s * batch:(s + 1) * batch, :] + jnp.dot(
            h2, time_whh, preferred_element_type=jnp.float32)
        h2, c2 = _lstm_cell_step(gates, c2, H)

    # ---------------- dense + sigmoid, fused as a VPU lane reduction ----------------
    logits = jnp.sum(h2 * dense_w, axis=-1, keepdims=True) + dense_b
    out_ref[...] = (0.5 * jnp.tanh(0.5 * logits) + 0.5).astype(out_ref.dtype)


# ---------------------------------------------------------------------------
# Wrapper: weight prep (transpose + gate reorder + 0.5 pre-scale + packing into one
# lane-dense slab) and the single pallas_call with exactly two input DMAs.
# ---------------------------------------------------------------------------
def _prep_lstm_params(w_ih, w_hh, b_ih, b_hh, in_pad=None):
    """PyTorch LSTM weights (row blocks [i, f, g, o]) -> kernel operands:
       W_ih^T (F[, padded], 4H), W_hh^T (H, 4H), bias (1, 4H), all f32, gate-reordered
       to [i, f, o, g], with the i/f/o gate columns pre-scaled by 0.5 so the kernel can
       use sigmoid(x) = 0.5*tanh(x/2) + 0.5 with a single full-vreg tanh."""
    H = w_hh.shape[1]

    def reorder(m):                    # [i, f, g, o] -> [i, f, o, g] along axis 0
        return jnp.concatenate(
            [m[0:H], m[H:2 * H], m[3 * H:4 * H], m[2 * H:3 * H]], axis=0)

    scale = jnp.concatenate(
        [jnp.full((3 * H,), 0.5, jnp.float32), jnp.ones((H,), jnp.float32)])

    wih_t = (reorder(w_ih).astype(jnp.float32) * scale[:, None]).T   # (F, 4H)
    whh_t = (reorder(w_hh).astype(jnp.float32) * scale[:, None]).T   # (H, 4H)
    bias = (reorder((b_ih + b_hh).astype(jnp.float32)) * scale).reshape(1, 4 * H)
    if in_pad is not None and in_pad > wih_t.shape[0]:
        wih_t = jnp.pad(wih_t, ((0, in_pad - wih_t.shape[0]), (0, 0)))
    return wih_t, whh_t, bias


def _pack_weight_slab(params, hidden):
    """Pack every weight/bias into ONE (120, 4H) lane-dense f32 slab:
       rows [0:16)   note W_ih^T (feature rows zero-padded 12->16)
       rows [16:48)  note W_hh^T
       rows [48:80)  time W_ih^T
       rows [80:112) time W_hh^T
       rows [112:120) misc block: note bias | time bias | dense_w (lanes 0:H) | dense_b (lane 0)
    """
    H = hidden
    n_wih, n_whh, n_b = _prep_lstm_params(
        params["note_w_ih"], params["note_w_hh"],
        params["note_b_ih"], params["note_b_hh"], in_pad=NOTE_IN_PAD)
    t_wih, t_whh, t_b = _prep_lstm_params(
        params["time_w_ih"], params["time_w_hh"],
        params["time_b_ih"], params["time_b_hh"])
    dense_w = jnp.zeros((1, 4 * H), jnp.float32).at[0, :H].set(
        params["dense_w"].reshape(H).astype(jnp.float32))
    dense_b = jnp.zeros((1, 4 * H), jnp.float32).at[0, 0].set(
        params["dense_b"].reshape(()).astype(jnp.float32))
    misc = jnp.concatenate(
        [n_b, t_b, dense_w, dense_b, jnp.zeros((4, 4 * H), jnp.float32)], axis=0)
    return jnp.concatenate([n_wih, n_whh, t_wih, t_whh, misc], axis=0)   # (120, 4H)


def lstm_discriminator_forward(params, data, hidden_size=HIDDEN, last_dim=LAST_DIM):
    B = data.shape[0]
    H = hidden_size
    note_in = NUM_OCTAVES * last_dim
    NBS = B * SEQ_LEN

    # (B, SEQ_LEN, OCTAVE*NUM_OCTAVES, last_dim) -> (B, SEQ_LEN, OCTAVE, note_in): free
    # contiguous reshape matching the PyTorch .view chain.  Then a single wrapper-side
    # transpose to (OCTAVE, SEQ_LEN, B, note_in): octave-major for the hoisted note GEMM
    # AND rows ordered s*B+b so the time-LSTM per-step slice is contiguous.  XLA fuses
    # the transpose with the cast/pad ahead of the single pallas_call.
    x = data.reshape(B, SEQ_LEN, OCTAVE, note_in)
    x = jnp.transpose(x, (2, 1, 0, 3)).reshape(OCTAVE * NBS, note_in).astype(jnp.float32)
    x = jnp.pad(x, ((0, 0), (0, NOTE_IN_PAD - note_in)))       # (OCTAVE*NBS, 16)

    slab = _pack_weight_slab(params, H)                        # (120, 128)

    kernel = functools.partial(
        _fused_discriminator_kernel,
        batch=B, seq_len=SEQ_LEN, octave=OCTAVE, hidden=H, in_pad=NOTE_IN_PAD)

    # No grid: both operands are whole-array VMEM blocks (~72 KiB total), one launch,
    # exactly two input DMAs.  cost_estimate tells XLA this call is microseconds-scale.
    return pl.pallas_call(
        kernel,
        out_shape=jax.ShapeDtypeStruct((B, 1), jnp.float32),
        cost_estimate=pl.CostEstimate(
            flops=3_000_000, transcendentals=35_000, bytes_accessed=75_000),
    )(x, slab)


# ---------------------------------------------------------------------------
# Parameter construction (deterministic, PyTorch-like uniform init).
# ---------------------------------------------------------------------------
def init_params(key, hidden_size=HIDDEN, last_dim=LAST_DIM):
    note_in = NUM_OCTAVES * last_dim
    bound = 1.0 / math.sqrt(hidden_size)

    def u(k, shape):
        return jax.random.uniform(k, shape, jnp.float32, -bound, bound)

    keys = jax.random.split(key, 10)
    return {
        # note_lstm
        "note_w_ih": u(keys[0], (4 * hidden_size, note_in)),
        "note_w_hh": u(keys[1], (4 * hidden_size, hidden_size)),
        "note_b_ih": u(keys[2], (4 * hidden_size,)),
        "note_b_hh": u(keys[3], (4 * hidden_size,)),
        # time_lstm
        "time_w_ih": u(keys[4], (4 * hidden_size, hidden_size)),
        "time_w_hh": u(keys[5], (4 * hidden_size, hidden_size)),
        "time_b_ih": u(keys[6], (4 * hidden_size,)),
        "time_b_hh": u(keys[7], (4 * hidden_size,)),
        # dense
        "dense_w": u(keys[8], (1, hidden_size)),
        "dense_b": u(keys[9], (1,)),
    }


# ---------------------------------------------------------------------------
# Pure-JAX reference (PyTorch gate order [i, f, g, o]) used as a correctness check.
# ---------------------------------------------------------------------------
def _lstm_last_hidden_ref(x, w_ih, w_hh, b_ih, b_hh):
    T, N, _ = x.shape
    H = w_hh.shape[1]
    h = jnp.zeros((N, H), jnp.float32)
    c = jnp.zeros((N, H), jnp.float32)
    for t in range(T):
        g = x[t] @ w_ih.T + h @ w_hh.T + b_ih + b_hh
        i = jax.nn.sigmoid(g[:, :H])
        f = jax.nn.sigmoid(g[:, H:2 * H])
        gg = jnp.tanh(g[:, 2 * H:3 * H])
        o = jax.nn.sigmoid(g[:, 3 * H:])
        c = f * c + i * gg
        h = o * jnp.tanh(c)
    return h


def lstm_discriminator_reference(params, data, hidden_size=HIDDEN, last_dim=LAST_DIM):
    B = data.shape[0]
    note_in = NUM_OCTAVES * last_dim
    x = jnp.transpose(data.reshape(B * SEQ_LEN, OCTAVE, note_in), (1, 0, 2))
    h1 = _lstm_last_hidden_ref(x, params["note_w_ih"], params["note_w_hh"],
                               params["note_b_ih"], params["note_b_hh"])
    x2 = jnp.transpose(h1.reshape(B, SEQ_LEN, hidden_size), (1, 0, 2))
    h2 = _lstm_last_hidden_ref(x2, params["time_w_ih"], params["time_w_hh"],
                               params["time_b_ih"], params["time_b_hh"])
    logits = h2 @ params["dense_w"].T + params["dense_b"]
    return jax.nn.sigmoid(logits)


if __name__ == "__main__":
    key = jax.random.PRNGKey(0)
    pkey, dkey = jax.random.split(key)
    params = init_params(pkey)
    data = jax.random.normal(
        dkey, (BATCH, SEQ_LEN, OCTAVE * NUM_OCTAVES, LAST_DIM), dtype=jnp.float32)

    fwd = jax.jit(lstm_discriminator_forward)
    probs = fwd(params, data)
    jax.block_until_ready(probs)

    assert probs.shape == (BATCH, 1)
    assert bool(jnp.all((probs > 0.0) & (probs < 1.0)))

    probs_ref = lstm_discriminator_reference(params, data)
    max_err = float(jnp.max(jnp.abs(probs - probs_ref)))
    assert max_err < 1e-3, f"mismatch vs pure-JAX reference: {max_err}"

    print("KERNEL_OK")
</pallas_src>

<mosaic_0001>
module attributes {stable_mosaic.version = 11 : i64} {
  func.func @_fused_discriminator_kernel(%arg0: memref<192x16xf32, #tpu.memory_space<vmem>>, %arg1: memref<120x128xf32, #tpu.memory_space<vmem>>, %arg2: memref<2x1xf32, #tpu.memory_space<vmem>>) attributes {dimension_semantics = [], scalar_prefetch = 0 : i64, scratch_operands = 0 : i64, tpu.core_type = #tpu.core_type<tc>} {
    %c0 = arith.constant 0 : index
    %c0_0 = arith.constant 0 : index
    %0 = vector.load %arg1[%c0, %c0_0] : memref<120x128xf32, #tpu.memory_space<vmem>>, vector<16x128xf32>
    %c16 = arith.constant 16 : index
    %c0_1 = arith.constant 0 : index
    %1 = vector.load %arg1[%c16, %c0_1] : memref<120x128xf32, #tpu.memory_space<vmem>>, vector<32x128xf32>
    %c48 = arith.constant 48 : index
    %c0_2 = arith.constant 0 : index
    %2 = vector.load %arg1[%c48, %c0_2] : memref<120x128xf32, #tpu.memory_space<vmem>>, vector<32x128xf32>
    %c80 = arith.constant 80 : index
    %c0_3 = arith.constant 0 : index
    %3 = vector.load %arg1[%c80, %c0_3] : memref<120x128xf32, #tpu.memory_space<vmem>>, vector<32x128xf32>
    %c112 = arith.constant 112 : index
    %c0_4 = arith.constant 0 : index
    %4 = vector.load %arg1[%c112, %c0_4] : memref<120x128xf32, #tpu.memory_space<vmem>>, vector<1x128xf32>
    %c113 = arith.constant 113 : index
    %c0_5 = arith.constant 0 : index
    %5 = vector.load %arg1[%c113, %c0_5] : memref<120x128xf32, #tpu.memory_space<vmem>>, vector<1x128xf32>
    %c114 = arith.constant 114 : index
    %c0_6 = arith.constant 0 : index
    %6 = vector.load %arg1[%c114, %c0_6] : memref<120x128xf32, #tpu.memory_space<vmem>>, vector<1x32xf32>
    %c115 = arith.constant 115 : index
    %c0_7 = arith.constant 0 : index
    %7 = vector.load %arg1[%c115, %c0_7] : memref<120x128xf32, #tpu.memory_space<vmem>>, vector<1x1xf32>
    %c0_8 = arith.constant 0 : index
    %c0_9 = arith.constant 0 : index
    %8 = vector.load %arg0[%c0_8, %c0_9] : memref<192x16xf32, #tpu.memory_space<vmem>>, vector<192x16xf32>
    %cst = arith.constant dense<0.000000e+00> : vector<192x128xf32>
    %9 = tpu.matmul %8, %0, %cst {dimension_numbers = #tpu.dot_dimension_numbers<[1], [0], [0], [1], [0, 0, 1, 1], [], []>} : vector<192x16xf32>, vector<16x128xf32>, vector<192x128xf32> -> vector<192x128xf32>
    %10 = vector.broadcast %4 : vector<1x128xf32> to vector<192x128xf32>
    %11 = arith.addf %9, %10 : vector<192x128xf32>
    %cst_10 = arith.constant 0.000000e+00 : f32
    %12 = vector.broadcast %cst_10 : f32 to vector<16x32xf32>
    %cst_11 = arith.constant 0.000000e+00 : f32
    %13 = vector.broadcast %cst_11 : f32 to vector<16x32xf32>
    %14 = vector.extract_strided_slice %11 {offsets = [0, 0], sizes = [16, 128], strides = [1, 1]} : vector<192x128xf32> to vector<16x128xf32>
    %cst_12 = arith.constant dense<0.000000e+00> : vector<16x128xf32>
    %15 = tpu.matmul %12, %1, %cst_12 {dimension_numbers = #tpu.dot_dimension_numbers<[1], [0], [0], [1], [0, 0, 1, 1], [], []>} : vector<16x32xf32>, vector<32x128xf32>, vector<16x128xf32> -> vector<16x128xf32>
    %16 = arith.addf %14, %15 : vector<16x128xf32>
    %17 = math.tanh %16 : vector<16x128xf32>
    %18 = vector.extract_strided_slice %17 {offsets = [0, 0], sizes = [16, 96], strides = [1, 1]} : vector<16x128xf32> to vector<16x96xf32>
    %cst_13 = arith.constant 5.000000e-01 : f32
    %19 = vector.broadcast %cst_13 : f32 to vector<16x96xf32>
    %20 = arith.mulf %18, %19 : vector<16x96xf32>
    %cst_14 = arith.constant 5.000000e-01 : f32
    %21 = vector.broadcast %cst_14 : f32 to vector<16x96xf32>
    %22 = arith.addf %20, %21 : vector<16x96xf32>
    %23 = vector.extract_strided_slice %22 {offsets = [0, 0], sizes = [16, 32], strides = [1, 1]} : vector<16x96xf32> to vector<16x32xf32>
    %24 = vector.extract_strided_slice %22 {offsets = [0, 32], sizes = [16, 32], strides = [1, 1]} : vector<16x96xf32> to vector<16x32xf32>
    %25 = vector.extract_strided_slice %22 {offsets = [0, 64], sizes = [16, 32], strides = [1, 1]} : vector<16x96xf32> to vector<16x32xf32>
    %26 = vector.extract_strided_slice %17 {offsets = [0, 96], sizes = [16, 32], strides = [1, 1]} : vector<16x128xf32> to vector<16x32xf32>
    %27 = arith.mulf %24, %13 : vector<16x32xf32>
    %28 = arith.mulf %23, %26 : vector<16x32xf32>
    %29 = arith.addf %27, %28 : vector<16x32xf32>
    %30 = math.tanh %29 : vector<16x32xf32>
    %31 = arith.mulf %25, %30 : vector<16x32xf32>
    %32 = vector.extract_strided_slice %11 {offsets = [16, 0], sizes = [16, 128], strides = [1, 1]} : vector<192x128xf32> to vector<16x128xf32>
    %cst_15 = arith.constant dense<0.000000e+00> : vector<16x128xf32>
    %33 = tpu.matmul %31, %1, %cst_15 {dimension_numbers = #tpu.dot_dimension_numbers<[1], [0], [0], [1], [0, 0, 1, 1], [], []>} : vector<16x32xf32>, vector<32x128xf32>, vector<16x128xf32> -> vector<16x128xf32>
    %34 = arith.addf %32, %33 : vector<16x128xf32>
    %35 = math.tanh %34 : vector<16x128xf32>
    %36 = vector.extract_strided_slice %35 {offsets = [0, 0], sizes = [16, 96], strides = [1, 1]} : vector<16x128xf32> to vector<16x96xf32>
    %cst_16 = arith.constant 5.000000e-01 : f32
    %37 = vector.broadcast %cst_16 : f32 to vector<16x96xf32>
    %38 = arith.mulf %36, %37 : vector<16x96xf32>
    %cst_17 = arith.constant 5.000000e-01 : f32
    %39 = vector.broadcast %cst_17 : f32 to vector<16x96xf32>
    %40 = arith.addf %38, %39 : vector<16x96xf32>
    %41 = vector.extract_strided_slice %40 {offsets = [0, 0], sizes = [16, 32], strides = [1, 1]} : vector<16x96xf32> to vector<16x32xf32>
    %42 = vector.extract_strided_slice %40 {offsets = [0, 32], sizes = [16, 32], strides = [1, 1]} : vector<16x96xf32> to vector<16x32xf32>
    %43 = vector.extract_strided_slice %40 {offsets = [0, 64], sizes = [16, 32], strides = [1, 1]} : vector<16x96xf32> to vector<16x32xf32>
    %44 = vector.extract_strided_slice %35 {offsets = [0, 96], sizes = [16, 32], strides = [1, 1]} : vector<16x128xf32> to vector<16x32xf32>
    %45 = arith.mulf %42, %29 : vector<16x32xf32>
    %46 = arith.mulf %41, %44 : vector<16x32xf32>
    %47 = arith.addf %45, %46 : vector<16x32xf32>
    %48 = math.tanh %47 : vector<16x32xf32>
    %49 = arith.mulf %43, %48 : vector<16x32xf32>
    %50 = vector.extract_strided_slice %11 {offsets = [32, 0], sizes = [16, 128], strides = [1, 1]} : vector<192x128xf32> to vector<16x128xf32>
    %cst_18 = arith.constant dense<0.000000e+00> : vector<16x128xf32>
    %51 = tpu.matmul %49, %1, %cst_18 {dimension_numbers = #tpu.dot_dimension_numbers<[1], [0], [0], [1], [0, 0, 1, 1], [], []>} : vector<16x32xf32>, vector<32x128xf32>, vector<16x128xf32> -> vector<16x128xf32>
    %52 = arith.addf %50, %51 : vector<16x128xf32>
    %53 = math.tanh %52 : vector<16x128xf32>
    %54 = vector.extract_strided_slice %53 {offsets = [0, 0], sizes = [16, 96], strides = [1, 1]} : vector<16x128xf32> to vector<16x96xf32>
    %cst_19 = arith.constant 5.000000e-01 : f32
    %55 = vector.broadcast %cst_19 : f32 to vector<16x96xf32>
    %56 = arith.mulf %54, %55 : vector<16x96xf32>
    %cst_20 = arith.constant 5.000000e-01 : f32
    %57 = vector.broadcast %cst_20 : f32 to vector<16x96xf32>
    %58 = arith.addf %56, %57 : vector<16x96xf32>
    %59 = vector.extract_strided_slice %58 {offsets = [0, 0], sizes = [16, 32], strides = [1, 1]} : vector<16x96xf32> to vector<16x32xf32>
    %60 = vector.extract_strided_slice %58 {offsets = [0, 32], sizes = [16, 32], strides = [1, 1]} : vector<16x96xf32> to vector<16x32xf32>
    %61 = vector.extract_strided_slice %58 {offsets = [0, 64], sizes = [16, 32], strides = [1, 1]} : vector<16x96xf32> to vector<16x32xf32>
    %62 = vector.extract_strided_slice %53 {offsets = [0, 96], sizes = [16, 32], strides = [1, 1]} : vector<16x128xf32> to vector<16x32xf32>
    %63 = arith.mulf %60, %47 : vector<16x32xf32>
    %64 = arith.mulf %59, %62 : vector<16x32xf32>
    %65 = arith.addf %63, %64 : vector<16x32xf32>
    %66 = math.tanh %65 : vector<16x32xf32>
    %67 = arith.mulf %61, %66 : vector<16x32xf32>
    %68 = vector.extract_strided_slice %11 {offsets = [48, 0], sizes = [16, 128], strides = [1, 1]} : vector<192x128xf32> to vector<16x128xf32>
    %cst_21 = arith.constant dense<0.000000e+00> : vector<16x128xf32>
    %69 = tpu.matmul %67, %1, %cst_21 {dimension_numbers = #tpu.dot_dimension_numbers<[1], [0], [0], [1], [0, 0, 1, 1], [], []>} : vector<16x32xf32>, vector<32x128xf32>, vector<16x128xf32> -> vector<16x128xf32>
    %70 = arith.addf %68, %69 : vector<16x128xf32>
    %71 = math.tanh %70 : vector<16x128xf32>
    %72 = vector.extract_strided_slice %71 {offsets = [0, 0], sizes = [16, 96], strides = [1, 1]} : vector<16x128xf32> to vector<16x96xf32>
    %cst_22 = arith.constant 5.000000e-01 : f32
    %73 = vector.broadcast %cst_22 : f32 to vector<16x96xf32>
    %74 = arith.mulf %72, %73 : vector<16x96xf32>
    %cst_23 = arith.constant 5.000000e-01 : f32
    %75 = vector.broadcast %cst_23 : f32 to vector<16x96xf32>
    %76 = arith.addf %74, %75 : vector<16x96xf32>
    %77 = vector.extract_strided_slice %76 {offsets = [0, 0], sizes = [16, 32], strides = [1, 1]} : vector<16x96xf32> to vector<16x32xf32>
    %78 = vector.extract_strided_slice %76 {offsets = [0, 32], sizes = [16, 32], strides = [1, 1]} : vector<16x96xf32> to vector<16x32xf32>
    %79 = vector.extract_strided_slice %76 {offsets = [0, 64], sizes = [16, 32], strides = [1, 1]} : vector<16x96xf32> to vector<16x32xf32>
    %80 = vector.extract_strided_slice %71 {offsets = [0, 96], sizes = [16, 32], strides = [1, 1]} : vector<16x128xf32> to vector<16x32xf32>
    %81 = arith.mulf %78, %65 : vector<16x32xf32>
    %82 = arith.mulf %77, %80 : vector<16x32xf32>
    %83 = arith.addf %81, %82 : vector<16x32xf32>
    %84 = math.tanh %83 : vector<16x32xf32>
    %85 = arith.mulf %79, %84 : vector<16x32xf32>
    %86 = vector.extract_strided_slice %11 {offsets = [64, 0], sizes = [16, 128], strides = [1, 1]} : vector<192x128xf32> to vector<16x128xf32>
    %cst_24 = arith.constant dense<0.000000e+00> : vector<16x128xf32>
    %87 = tpu.matmul %85, %1, %cst_24 {dimension_numbers = #tpu.dot_dimension_numbers<[1], [0], [0], [1], [0, 0, 1, 1], [], []>} : vector<16x32xf32>, vector<32x128xf32>, vector<16x128xf32> -> vector<16x128xf32>
    %88 = arith.addf %86, %87 : vector<16x128xf32>
    %89 = math.tanh %88 : vector<16x128xf32>
    %90 = vector.extract_strided_slice %89 {offsets = [0, 0], sizes = [16, 96], strides = [1, 1]} : vector<16x128xf32> to vector<16x96xf32>
    %cst_25 = arith.constant 5.000000e-01 : f32
    %91 = vector.broadcast %cst_25 : f32 to vector<16x96xf32>
    %92 = arith.mulf %90, %91 : vector<16x96xf32>
    %cst_26 = arith.constant 5.000000e-01 : f32
    %93 = vector.broadcast %cst_26 : f32 to vector<16x96xf32>
    %94 = arith.addf %92, %93 : vector<16x96xf32>
    %95 = vector.extract_strided_slice %94 {offsets = [0, 0], sizes = [16, 32], strides = [1, 1]} : vector<16x96xf32> to vector<16x32xf32>
    %96 = vector.extract_strided_slice %94 {offsets = [0, 32], sizes = [16, 32], strides = [1, 1]} : vector<16x96xf32> to vector<16x32xf32>
    %97 = vector.extract_strided_slice %94 {offsets = [0, 64], sizes = [16, 32], strides = [1, 1]} : vector<16x96xf32> to vector<16x32xf32>
    %98 = vector.extract_strided_slice %89 {offsets = [0, 96], sizes = [16, 32], strides = [1, 1]} : vector<16x128xf32> to vector<16x32xf32>
    %99 = arith.mulf %96, %83 : vector<16x32xf32>
    %100 = arith.mulf %95, %98 : vector<16x32xf32>
    %101 = arith.addf %99, %100 : vector<16x32xf32>
    %102 = math.tanh %101 : vector<16x32xf32>
    %103 = arith.mulf %97, %102 : vector<16x32xf32>
    %104 = vector.extract_strided_slice %11 {offsets = [80, 0], sizes = [16, 128], strides = [1, 1]} : vector<192x128xf32> to vector<16x128xf32>
    %cst_27 = arith.constant dense<0.000000e+00> : vector<16x128xf32>
    %105 = tpu.matmul %103, %1, %cst_27 {dimension_numbers = #tpu.dot_dimension_numbers<[1], [0], [0], [1], [0, 0, 1, 1], [], []>} : vector<16x32xf32>, vector<32x128xf32>, vector<16x128xf32> -> vector<16x128xf32>
    %106 = arith.addf %104, %105 : vector<16x128xf32>
    %107 = math.tanh %106 : vector<16x128xf32>
    %108 = vector.extract_strided_slice %107 {offsets = [0, 0], sizes = [16, 96], strides = [1, 1]} : vector<16x128xf32> to vector<16x96xf32>
    %cst_28 = arith.constant 5.000000e-01 : f32
    %109 = vector.broadcast %cst_28 : f32 to vector<16x96xf32>
    %110 = arith.mulf %108, %109 : vector<16x96xf32>
    %cst_29 = arith.constant 5.000000e-01 : f32
    %111 = vector.broadcast %cst_29 : f32 to vector<16x96xf32>
    %112 = arith.addf %110, %111 : vector<16x96xf32>
    %113 = vector.extract_strided_slice %112 {offsets = [0, 0], sizes = [16, 32], strides = [1, 1]} : vector<16x96xf32> to vector<16x32xf32>
    %114 = vector.extract_strided_slice %112 {offsets = [0, 32], sizes = [16, 32], strides = [1, 1]} : vector<16x96xf32> to vector<16x32xf32>
    %115 = vector.extract_strided_slice %112 {offsets = [0, 64], sizes = [16, 32], strides = [1, 1]} : vector<16x96xf32> to vector<16x32xf32>
    %116 = vector.extract_strided_slice %107 {offsets = [0, 96], sizes = [16, 32], strides = [1, 1]} : vector<16x128xf32> to vector<16x32xf32>
    %117 = arith.mulf %114, %101 : vector<16x32xf32>
    %118 = arith.mulf %113, %116 : vector<16x32xf32>
    %119 = arith.addf %117, %118 : vector<16x32xf32>
    %120 = math.tanh %119 : vector<16x32xf32>
    %121 = arith.mulf %115, %120 : vector<16x32xf32>
    %122 = vector.extract_strided_slice %11 {offsets = [96, 0], sizes = [16, 128], strides = [1, 1]} : vector<192x128xf32> to vector<16x128xf32>
    %cst_30 = arith.constant dense<0.000000e+00> : vector<16x128xf32>
    %123 = tpu.matmul %121, %1, %cst_30 {dimension_numbers = #tpu.dot_dimension_numbers<[1], [0], [0], [1], [0, 0, 1, 1], [], []>} : vector<16x32xf32>, vector<32x128xf32>, vector<16x128xf32> -> vector<16x128xf32>
    %124 = arith.addf %122, %123 : vector<16x128xf32>
    %125 = math.tanh %124 : vector<16x128xf32>
    %126 = vector.extract_strided_slice %125 {offsets = [0, 0], sizes = [16, 96], strides = [1, 1]} : vector<16x128xf32> to vector<16x96xf32>
    %cst_31 = arith.constant 5.000000e-01 : f32
    %127 = vector.broadcast %cst_31 : f32 to vector<16x96xf32>
    %128 = arith.mulf %126, %127 : vector<16x96xf32>
    %cst_32 = arith.constant 5.000000e-01 : f32
    %129 = vector.broadcast %cst_32 : f32 to vector<16x96xf32>
    %130 = arith.addf %128, %129 : vector<16x96xf32>
    %131 = vector.extract_strided_slice %130 {offsets = [0, 0], sizes = [16, 32], strides = [1, 1]} : vector<16x96xf32> to vector<16x32xf32>
    %132 = vector.extract_strided_slice %130 {offsets = [0, 32], sizes = [16, 32], strides = [1, 1]} : vector<16x96xf32> to vector<16x32xf32>
    %133 = vector.extract_strided_slice %130 {offsets = [0, 64], sizes = [16, 32], strides = [1, 1]} : vector<16x96xf32> to vector<16x32xf32>
    %134 = vector.extract_strided_slice %125 {offsets = [0, 96], sizes = [16, 32], strides = [1, 1]} : vector<16x128xf32> to vector<16x32xf32>
    %135 = arith.mulf %132, %119 : vector<16x32xf32>
    %136 = arith.mulf %131, %134 : vector<16x32xf32>
    %137 = arith.addf %135, %136 : vector<16x32xf32>
    %138 = math.tanh %137 : vector<16x32xf32>
    %139 = arith.mulf %133, %138 : vector<16x32xf32>
    %140 = vector.extract_strided_slice %11 {offsets = [112, 0], sizes = [16, 128], strides = [1, 1]} : vector<192x128xf32> to vector<16x128xf32>
    %cst_33 = arith.constant dense<0.000000e+00> : vector<16x128xf32>
    %141 = tpu.matmul %139, %1, %cst_33 {dimension_numbers = #tpu.dot_dimension_numbers<[1], [0], [0], [1], [0, 0, 1, 1], [], []>} : vector<16x32xf32>, vector<32x128xf32>, vector<16x128xf32> -> vector<16x128xf32>
    %142 = arith.addf %140, %141 : vector<16x128xf32>
    %143 = math.tanh %142 : vector<16x128xf32>
    %144 = vector.extract_strided_slice %143 {offsets = [0, 0], sizes = [16, 96], strides = [1, 1]} : vector<16x128xf32> to vector<16x96xf32>
    %cst_34 = arith.constant 5.000000e-01 : f32
    %145 = vector.broadcast %cst_34 : f32 to vector<16x96xf32>
    %146 = arith.mulf %144, %145 : vector<16x96xf32>
    %cst_35 = arith.constant 5.000000e-01 : f32
    %147 = vector.broadcast %cst_35 : f32 to vector<16x96xf32>
    %148 = arith.addf %146, %147 : vector<16x96xf32>
    %149 = vector.extract_strided_slice %148 {offsets = [0, 0], sizes = [16, 32], strides = [1, 1]} : vector<16x96xf32> to vector<16x32xf32>
    %150 = vector.extract_strided_slice %148 {offsets = [0, 32], sizes = [16, 32], strides = [1, 1]} : vector<16x96xf32> to vector<16x32xf32>
    %151 = vector.extract_strided_slice %148 {offsets = [0, 64], sizes = [16, 32], strides = [1, 1]} : vector<16x96xf32> to vector<16x32xf32>
    %152 = vector.extract_strided_slice %143 {offsets = [0, 96], sizes = [16, 32], strides = [1, 1]} : vector<16x128xf32> to vector<16x32xf32>
    %153 = arith.mulf %150, %137 : vector<16x32xf32>
    %154 = arith.mulf %149, %152 : vector<16x32xf32>
    %155 = arith.addf %153, %154 : vector<16x32xf32>
    %156 = math.tanh %155 : vector<16x32xf32>
    %157 = arith.mulf %151, %156 : vector<16x32xf32>
    %158 = vector.extract_strided_slice %11 {offsets = [128, 0], sizes = [16, 128], strides = [1, 1]} : vector<192x128xf32> to vector<16x128xf32>
    %cst_36 = arith.constant dense<0.000000e+00> : vector<16x128xf32>
    %159 = tpu.matmul %157, %1, %cst_36 {dimension_numbers = #tpu.dot_dimension_numbers<[1], [0], [0], [1], [0, 0, 1, 1], [], []>} : vector<16x32xf32>, vector<32x128xf32>, vector<16x128xf32> -> vector<16x128xf32>
    %160 = arith.addf %158, %159 : vector<16x128xf32>
    %161 = math.tanh %160 : vector<16x128xf32>
    %162 = vector.extract_strided_slice %161 {offsets = [0, 0], sizes = [16, 96], strides = [1, 1]} : vector<16x128xf32> to vector<16x96xf32>
    %cst_37 = arith.constant 5.000000e-01 : f32
    %163 = vector.broadcast %cst_37 : f32 to vector<16x96xf32>
    %164 = arith.mulf %162, %163 : vector<16x96xf32>
    %cst_38 = arith.constant 5.000000e-01 : f32
    %165 = vector.broadcast %cst_38 : f32 to vector<16x96xf32>
    %166 = arith.addf %164, %165 : vector<16x96xf32>
    %167 = vector.extract_strided_slice %166 {offsets = [0, 0], sizes = [16, 32], strides = [1, 1]} : vector<16x96xf32> to vector<16x32xf32>
    %168 = vector.extract_strided_slice %166 {offsets = [0, 32], sizes = [16, 32], strides = [1, 1]} : vector<16x96xf32> to vector<16x32xf32>
    %169 = vector.extract_strided_slice %166 {offsets = [0, 64], sizes = [16, 32], strides = [1, 1]} : vector<16x96xf32> to vector<16x32xf32>
    %170 = vector.extract_strided_slice %161 {offsets = [0, 96], sizes = [16, 32], strides = [1, 1]} : vector<16x128xf32> to vector<16x32xf32>
    %171 = arith.mulf %168, %155 : vector<16x32xf32>
    %172 = arith.mulf %167, %170 : vector<16x32xf32>
    %173 = arith.addf %171, %172 : vector<16x32xf32>
    %174 = math.tanh %173 : vector<16x32xf32>
    %175 = arith.mulf %169, %174 : vector<16x32xf32>
    %176 = vector.extract_strided_slice %11 {offsets = [144, 0], sizes = [16, 128], strides = [1, 1]} : vector<192x128xf32> to vector<16x128xf32>
    %cst_39 = arith.constant dense<0.000000e+00> : vector<16x128xf32>
    %177 = tpu.matmul %175, %1, %cst_39 {dimension_numbers = #tpu.dot_dimension_numbers<[1], [0], [0], [1], [0, 0, 1, 1], [], []>} : vector<16x32xf32>, vector<32x128xf32>, vector<16x128xf32> -> vector<16x128xf32>
    %178 = arith.addf %176, %177 : vector<16x128xf32>
    %179 = math.tanh %178 : vector<16x128xf32>
    %180 = vector.extract_strided_slice %179 {offsets = [0, 0], sizes = [16, 96], strides = [1, 1]} : vector<16x128xf32> to vector<16x96xf32>
    %cst_40 = arith.constant 5.000000e-01 : f32
    %181 = vector.broadcast %cst_40 : f32 to vector<16x96xf32>
    %182 = arith.mulf %180, %181 : vector<16x96xf32>
    %cst_41 = arith.constant 5.000000e-01 : f32
    %183 = vector.broadcast %cst_41 : f32 to vector<16x96xf32>
    %184 = arith.addf %182, %183 : vector<16x96xf32>
    %185 = vector.extract_strided_slice %184 {offsets = [0, 0], sizes = [16, 32], strides = [1, 1]} : vector<16x96xf32> to vector<16x32xf32>
    %186 = vector.extract_strided_slice %184 {offsets = [0, 32], sizes = [16, 32], strides = [1, 1]} : vector<16x96xf32> to vector<16x32xf32>
    %187 = vector.extract_strided_slice %184 {offsets = [0, 64], sizes = [16, 32], strides = [1, 1]} : vector<16x96xf32> to vector<16x32xf32>
    %188 = vector.extract_strided_slice %179 {offsets = [0, 96], sizes = [16, 32], strides = [1, 1]} : vector<16x128xf32> to vector<16x32xf32>
    %189 = arith.mulf %186, %173 : vector<16x32xf32>
    %190 = arith.mulf %185, %188 : vector<16x32xf32>
    %191 = arith.addf %189, %190 : vector<16x32xf32>
    %192 = math.tanh %191 : vector<16x32xf32>
    %193 = arith.mulf %187, %192 : vector<16x32xf32>
    %194 = vector.extract_strided_slice %11 {offsets = [160, 0], sizes = [16, 128], strides = [1, 1]} : vector<192x128xf32> to vector<16x128xf32>
    %cst_42 = arith.constant dense<0.000000e+00> : vector<16x128xf32>
    %195 = tpu.matmul %193, %1, %cst_42 {dimension_numbers = #tpu.dot_dimension_numbers<[1], [0], [0], [1], [0, 0, 1, 1], [], []>} : vector<16x32xf32>, vector<32x128xf32>, vector<16x128xf32> -> vector<16x128xf32>
    %196 = arith.addf %194, %195 : vector<16x128xf32>
    %197 = math.tanh %196 : vector<16x128xf32>
    %198 = vector.extract_strided_slice %197 {offsets = [0, 0], sizes = [16, 96], strides = [1, 1]} : vector<16x128xf32> to vector<16x96xf32>
    %cst_43 = arith.constant 5.000000e-01 : f32
    %199 = vector.broadcast %cst_43 : f32 to vector<16x96xf32>
    %200 = arith.mulf %198, %199 : vector<16x96xf32>
    %cst_44 = arith.constant 5.000000e-01 : f32
    %201 = vector.broadcast %cst_44 : f32 to vector<16x96xf32>
    %202 = arith.addf %200, %201 : vector<16x96xf32>
    %203 = vector.extract_strided_slice %202 {offsets = [0, 0], sizes = [16, 32], strides = [1, 1]} : vector<16x96xf32> to vector<16x32xf32>
    %204 = vector.extract_strided_slice %202 {offsets = [0, 32], sizes = [16, 32], strides = [1, 1]} : vector<16x96xf32> to vector<16x32xf32>
    %205 = vector.extract_strided_slice %202 {offsets = [0, 64], sizes = [16, 32], strides = [1, 1]} : vector<16x96xf32> to vector<16x32xf32>
    %206 = vector.extract_strided_slice %197 {offsets = [0, 96], sizes = [16, 32], strides = [1, 1]} : vector<16x128xf32> to vector<16x32xf32>
    %207 = arith.mulf %204, %191 : vector<16x32xf32>
    %208 = arith.mulf %203, %206 : vector<16x32xf32>
    %209 = arith.addf %207, %208 : vector<16x32xf32>
    %210 = math.tanh %209 : vector<16x32xf32>
    %211 = arith.mulf %205, %210 : vector<16x32xf32>
    %212 = vector.extract_strided_slice %11 {offsets = [176, 0], sizes = [16, 128], strides = [1, 1]} : vector<192x128xf32> to vector<16x128xf32>
    %cst_45 = arith.constant dense<0.000000e+00> : vector<16x128xf32>
    %213 = tpu.matmul %211, %1, %cst_45 {dimension_numbers = #tpu.dot_dimension_numbers<[1], [0], [0], [1], [0, 0, 1, 1], [], []>} : vector<16x32xf32>, vector<32x128xf32>, vector<16x128xf32> -> vector<16x128xf32>
    %214 = arith.addf %212, %213 : vector<16x128xf32>
    %215 = math.tanh %214 : vector<16x128xf32>
    %216 = vector.extract_strided_slice %215 {offsets = [0, 0], sizes = [16, 96], strides = [1, 1]} : vector<16x128xf32> to vector<16x96xf32>
    %cst_46 = arith.constant 5.000000e-01 : f32
    %217 = vector.broadcast %cst_46 : f32 to vector<16x96xf32>
    %218 = arith.mulf %216, %217 : vector<16x96xf32>
    %cst_47 = arith.constant 5.000000e-01 : f32
    %219 = vector.broadcast %cst_47 : f32 to vector<16x96xf32>
    %220 = arith.addf %218, %219 : vector<16x96xf32>
    %221 = vector.extract_strided_slice %220 {offsets = [0, 0], sizes = [16, 32], strides = [1, 1]} : vector<16x96xf32> to vector<16x32xf32>
    %222 = vector.extract_strided_slice %220 {offsets = [0, 32], sizes = [16, 32], strides = [1, 1]} : vector<16x96xf32> to vector<16x32xf32>
    %223 = vector.extract_strided_slice %220 {offsets = [0, 64], sizes = [16, 32], strides = [1, 1]} : vector<16x96xf32> to vector<16x32xf32>
    %224 = vector.extract_strided_slice %215 {offsets = [0, 96], sizes = [16, 32], strides = [1, 1]} : vector<16x128xf32> to vector<16x32xf32>
    %225 = arith.mulf %222, %209 : vector<16x32xf32>
    %226 = arith.mulf %221, %224 : vector<16x32xf32>
    %227 = arith.addf %225, %226 : vector<16x32xf32>
    %228 = math.tanh %227 : vector<16x32xf32>
    %229 = arith.mulf %223, %228 : vector<16x32xf32>
    %cst_48 = arith.constant dense<0.000000e+00> : vector<16x128xf32>
    %230 = tpu.matmul %229, %2, %cst_48 {dimension_numbers = #tpu.dot_dimension_numbers<[1], [0], [0], [1], [0, 0, 1, 1], [], []>} : vector<16x32xf32>, vector<32x128xf32>, vector<16x128xf32> -> vector<16x128xf32>
    %231 = vector.broadcast %5 : vector<1x128xf32> to vector<16x128xf32>
    %232 = arith.addf %230, %231 : vector<16x128xf32>
    %cst_49 = arith.constant 0.000000e+00 : f32
    %233 = vector.broadcast %cst_49 : f32 to vector<2x32xf32>
    %cst_50 = arith.constant 0.000000e+00 : f32
    %234 = vector.broadcast %cst_50 : f32 to vector<2x32xf32>
    %235 = vector.extract_strided_slice %232 {offsets = [0, 0], sizes = [2, 128], strides = [1, 1]} : vector<16x128xf32> to vector<2x128xf32>
    %cst_51 = arith.constant dense<0.000000e+00> : vector<2x128xf32>
    %236 = tpu.matmul %233, %3, %cst_51 {dimension_numbers = #tpu.dot_dimension_numbers<[1], [0], [0], [1], [0, 0, 1, 1], [], []>} : vector<2x32xf32>, vector<32x128xf32>, vector<2x128xf32> -> vector<2x128xf32>
    %237 = arith.addf %235, %236 : vector<2x128xf32>
    %238 = math.tanh %237 : vector<2x128xf32>
    %239 = vector.extract_strided_slice %238 {offsets = [0, 0], sizes = [2, 96], strides = [1, 1]} : vector<2x128xf32> to vector<2x96xf32>
    %cst_52 = arith.constant 5.000000e-01 : f32
    %240 = vector.broadcast %cst_52 : f32 to vector<2x96xf32>
    %241 = arith.mulf %239, %240 : vector<2x96xf32>
    %cst_53 = arith.constant 5.000000e-01 : f32
    %242 = vector.broadcast %cst_53 : f32 to vector<2x96xf32>
    %243 = arith.addf %241, %242 : vector<2x96xf32>
    %244 = vector.extract_strided_slice %243 {offsets = [0, 0], sizes = [2, 32], strides = [1, 1]} : vector<2x96xf32> to vector<2x32xf32>
    %245 = vector.extract_strided_slice %243 {offsets = [0, 32], sizes = [2, 32], strides = [1, 1]} : vector<2x96xf32> to vector<2x32xf32>
    %246 = vector.extract_strided_slice %243 {offsets = [0, 64], sizes = [2, 32], strides = [1, 1]} : vector<2x96xf32> to vector<2x32xf32>
    %247 = vector.extract_strided_slice %238 {offsets = [0, 96], sizes = [2, 32], strides = [1, 1]} : vector<2x128xf32> to vector<2x32xf32>
    %248 = arith.mulf %245, %234 : vector<2x32xf32>
    %249 = arith.mulf %244, %247 : vector<2x32xf32>
    %250 = arith.addf %248, %249 : vector<2x32xf32>
    %251 = math.tanh %250 : vector<2x32xf32>
    %252 = arith.mulf %246, %251 : vector<2x32xf32>
    %253 = vector.extract_strided_slice %232 {offsets = [2, 0], sizes = [2, 128], strides = [1, 1]} : vector<16x128xf32> to vector<2x128xf32>
    %cst_54 = arith.constant dense<0.000000e+00> : vector<2x128xf32>
    %254 = tpu.matmul %252, %3, %cst_54 {dimension_numbers = #tpu.dot_dimension_numbers<[1], [0], [0], [1], [0, 0, 1, 1], [], []>} : vector<2x32xf32>, vector<32x128xf32>, vector<2x128xf32> -> vector<2x128xf32>
    %255 = arith.addf %253, %254 : vector<2x128xf32>
    %256 = math.tanh %255 : vector<2x128xf32>
    %257 = vector.extract_strided_slice %256 {offsets = [0, 0], sizes = [2, 96], strides = [1, 1]} : vector<2x128xf32> to vector<2x96xf32>
    %cst_55 = arith.constant 5.000000e-01 : f32
    %258 = vector.broadcast %cst_55 : f32 to vector<2x96xf32>
    %259 = arith.mulf %257, %258 : vector<2x96xf32>
    %cst_56 = arith.constant 5.000000e-01 : f32
    %260 = vector.broadcast %cst_56 : f32 to vector<2x96xf32>
    %261 = arith.addf %259, %260 : vector<2x96xf32>
    %262 = vector.extract_strided_slice %261 {offsets = [0, 0], sizes = [2, 32], strides = [1, 1]} : vector<2x96xf32> to vector<2x32xf32>
    %263 = vector.extract_strided_slice %261 {offsets = [0, 32], sizes = [2, 32], strides = [1, 1]} : vector<2x96xf32> to vector<2x32xf32>
    %264 = vector.extract_strided_slice %261 {offsets = [0, 64], sizes = [2, 32], strides = [1, 1]} : vector<2x96xf32> to vector<2x32xf32>
    %265 = vector.extract_strided_slice %256 {offsets = [0, 96], sizes = [2, 32], strides = [1, 1]} : vector<2x128xf32> to vector<2x32xf32>
    %266 = arith.mulf %263, %250 : vector<2x32xf32>
    %267 = arith.mulf %262, %265 : vector<2x32xf32>
    %268 = arith.addf %266, %267 : vector<2x32xf32>
    %269 = math.tanh %268 : vector<2x32xf32>
    %270 = arith.mulf %264, %269 : vector<2x32xf32>
    %271 = vector.extract_strided_slice %232 {offsets = [4, 0], sizes = [2, 128], strides = [1, 1]} : vector<16x128xf32> to vector<2x128xf32>
    %cst_57 = arith.constant dense<0.000000e+00> : vector<2x128xf32>
    %272 = tpu.matmul %270, %3, %cst_57 {dimension_numbers = #tpu.dot_dimension_numbers<[1], [0], [0], [1], [0, 0, 1, 1], [], []>} : vector<2x32xf32>, vector<32x128xf32>, vector<2x128xf32> -> vector<2x128xf32>
    %273 = arith.addf %271, %272 : vector<2x128xf32>
    %274 = math.tanh %273 : vector<2x128xf32>
    %275 = vector.extract_strided_slice %274 {offsets = [0, 0], sizes = [2, 96], strides = [1, 1]} : vector<2x128xf32> to vector<2x96xf32>
    %cst_58 = arith.constant 5.000000e-01 : f32
    %276 = vector.broadcast %cst_58 : f32 to vector<2x96xf32>
    %277 = arith.mulf %275, %276 : vector<2x96xf32>
    %cst_59 = arith.constant 5.000000e-01 : f32
    %278 = vector.broadcast %cst_59 : f32 to vector<2x96xf32>
    %279 = arith.addf %277, %278 : vector<2x96xf32>
    %280 = vector.extract_strided_slice %279 {offsets = [0, 0], sizes = [2, 32], strides = [1, 1]} : vector<2x96xf32> to vector<2x32xf32>
    %281 = vector.extract_strided_slice %279 {offsets = [0, 32], sizes = [2, 32], strides = [1, 1]} : vector<2x96xf32> to vector<2x32xf32>
    %282 = vector.extract_strided_slice %279 {offsets = [0, 64], sizes = [2, 32], strides = [1, 1]} : vector<2x96xf32> to vector<2x32xf32>
    %283 = vector.extract_strided_slice %274 {offsets = [0, 96], sizes = [2, 32], strides = [1, 1]} : vector<2x128xf32> to vector<2x32xf32>
    %284 = arith.mulf %281, %268 : vector<2x32xf32>
    %285 = arith.mulf %280, %283 : vector<2x32xf32>
    %286 = arith.addf %284, %285 : vector<2x32xf32>
    %287 = math.tanh %286 : vector<2x32xf32>
    %288 = arith.mulf %282, %287 : vector<2x32xf32>
    %289 = vector.extract_strided_slice %232 {offsets = [6, 0], sizes = [2, 128], strides = [1, 1]} : vector<16x128xf32> to vector<2x128xf32>
    %cst_60 = arith.constant dense<0.000000e+00> : vector<2x128xf32>
    %290 = tpu.matmul %288, %3, %cst_60 {dimension_numbers = #tpu.dot_dimension_numbers<[1], [0], [0], [1], [0, 0, 1, 1], [], []>} : vector<2x32xf32>, vector<32x128xf32>, vector<2x128xf32> -> vector<2x128xf32>
    %291 = arith.addf %289, %290 : vector<2x128xf32>
    %292 = math.tanh %291 : vector<2x128xf32>
    %293 = vector.extract_strided_slice %292 {offsets = [0, 0], sizes = [2, 96], strides = [1, 1]} : vector<2x128xf32> to vector<2x96xf32>
    %cst_61 = arith.constant 5.000000e-01 : f32
    %294 = vector.broadcast %cst_61 : f32 to vector<2x96xf32>
    %295 = arith.mulf %293, %294 : vector<2x96xf32>
    %cst_62 = arith.constant 5.000000e-01 : f32
    %296 = vector.broadcast %cst_62 : f32 to vector<2x96xf32>
    %297 = arith.addf %295, %296 : vector<2x96xf32>
    %298 = vector.extract_strided_slice %297 {offsets = [0, 0], sizes = [2, 32], strides = [1, 1]} : vector<2x96xf32> to vector<2x32xf32>
    %299 = vector.extract_strided_slice %297 {offsets = [0, 32], sizes = [2, 32], strides = [1, 1]} : vector<2x96xf32> to vector<2x32xf32>
    %300 = vector.extract_strided_slice %297 {offsets = [0, 64], sizes = [2, 32], strides = [1, 1]} : vector<2x96xf32> to vector<2x32xf32>
    %301 = vector.extract_strided_slice %292 {offsets = [0, 96], sizes = [2, 32], strides = [1, 1]} : vector<2x128xf32> to vector<2x32xf32>
    %302 = arith.mulf %299, %286 : vector<2x32xf32>
    %303 = arith.mulf %298, %301 : vector<2x32xf32>
    %304 = arith.addf %302, %303 : vector<2x32xf32>
    %305 = math.tanh %304 : vector<2x32xf32>
    %306 = arith.mulf %300, %305 : vector<2x32xf32>
    %307 = vector.extract_strided_slice %232 {offsets = [8, 0], sizes = [2, 128], strides = [1, 1]} : vector<16x128xf32> to vector<2x128xf32>
    %cst_63 = arith.constant dense<0.000000e+00> : vector<2x128xf32>
    %308 = tpu.matmul %306, %3, %cst_63 {dimension_numbers = #tpu.dot_dimension_numbers<[1], [0], [0], [1], [0, 0, 1, 1], [], []>} : vector<2x32xf32>, vector<32x128xf32>, vector<2x128xf32> -> vector<2x128xf32>
    %309 = arith.addf %307, %308 : vector<2x128xf32>
    %310 = math.tanh %309 : vector<2x128xf32>
    %311 = vector.extract_strided_slice %310 {offsets = [0, 0], sizes = [2, 96], strides = [1, 1]} : vector<2x128xf32> to vector<2x96xf32>
    %cst_64 = arith.constant 5.000000e-01 : f32
    %312 = vector.broadcast %cst_64 : f32 to vector<2x96xf32>
    %313 = arith.mulf %311, %312 : vector<2x96xf32>
    %cst_65 = arith.constant 5.000000e-01 : f32
    %314 = vector.broadcast %cst_65 : f32 to vector<2x96xf32>
    %315 = arith.addf %313, %314 : vector<2x96xf32>
    %316 = vector.extract_strided_slice %315 {offsets = [0, 0], sizes = [2, 32], strides = [1, 1]} : vector<2x96xf32> to vector<2x32xf32>
    %317 = vector.extract_strided_slice %315 {offsets = [0, 32], sizes = [2, 32], strides = [1, 1]} : vector<2x96xf32> to vector<2x32xf32>
    %318 = vector.extract_strided_slice %315 {offsets = [0, 64], sizes = [2, 32], strides = [1, 1]} : vector<2x96xf32> to vector<2x32xf32>
    %319 = vector.extract_strided_slice %310 {offsets = [0, 96], sizes = [2, 32], strides = [1, 1]} : vector<2x128xf32> to vector<2x32xf32>
    %320 = arith.mulf %317, %304 : vector<2x32xf32>
    %321 = arith.mulf %316, %319 : vector<2x32xf32>
    %322 = arith.addf %320, %321 : vector<2x32xf32>
    %323 = math.tanh %322 : vector<2x32xf32>
    %324 = arith.mulf %318, %323 : vector<2x32xf32>
    %325 = vector.extract_strided_slice %232 {offsets = [10, 0], sizes = [2, 128], strides = [1, 1]} : vector<16x128xf32> to vector<2x128xf32>
    %cst_66 = arith.constant dense<0.000000e+00> : vector<2x128xf32>
    %326 = tpu.matmul %324, %3, %cst_66 {dimension_numbers = #tpu.dot_dimension_numbers<[1], [0], [0], [1], [0, 0, 1, 1], [], []>} : vector<2x32xf32>, vector<32x128xf32>, vector<2x128xf32> -> vector<2x128xf32>
    %327 = arith.addf %325, %326 : vector<2x128xf32>
    %328 = math.tanh %327 : vector<2x128xf32>
    %329 = vector.extract_strided_slice %328 {offsets = [0, 0], sizes = [2, 96], strides = [1, 1]} : vector<2x128xf32> to vector<2x96xf32>
    %cst_67 = arith.constant 5.000000e-01 : f32
    %330 = vector.broadcast %cst_67 : f32 to vector<2x96xf32>
    %331 = arith.mulf %329, %330 : vector<2x96xf32>
    %cst_68 = arith.constant 5.000000e-01 : f32
    %332 = vector.broadcast %cst_68 : f32 to vector<2x96xf32>
    %333 = arith.addf %331, %332 : vector<2x96xf32>
    %334 = vector.extract_strided_slice %333 {offsets = [0, 0], sizes = [2, 32], strides = [1, 1]} : vector<2x96xf32> to vector<2x32xf32>
    %335 = vector.extract_strided_slice %333 {offsets = [0, 32], sizes = [2, 32], strides = [1, 1]} : vector<2x96xf32> to vector<2x32xf32>
    %336 = vector.extract_strided_slice %333 {offsets = [0, 64], sizes = [2, 32], strides = [1, 1]} : vector<2x96xf32> to vector<2x32xf32>
    %337 = vector.extract_strided_slice %328 {offsets = [0, 96], sizes = [2, 32], strides = [1, 1]} : vector<2x128xf32> to vector<2x32xf32>
    %338 = arith.mulf %335, %322 : vector<2x32xf32>
    %339 = arith.mulf %334, %337 : vector<2x32xf32>
    %340 = arith.addf %338, %339 : vector<2x32xf32>
    %341 = math.tanh %340 : vector<2x32xf32>
    %342 = arith.mulf %336, %341 : vector<2x32xf32>
    %343 = vector.extract_strided_slice %232 {offsets = [12, 0], sizes = [2, 128], strides = [1, 1]} : vector<16x128xf32> to vector<2x128xf32>
    %cst_69 = arith.constant dense<0.000000e+00> : vector<2x128xf32>
    %344 = tpu.matmul %342, %3, %cst_69 {dimension_numbers = #tpu.dot_dimension_numbers<[1], [0], [0], [1], [0, 0, 1, 1], [], []>} : vector<2x32xf32>, vector<32x128xf32>, vector<2x128xf32> -> vector<2x128xf32>
    %345 = arith.addf %343, %344 : vector<2x128xf32>
    %346 = math.tanh %345 : vector<2x128xf32>
    %347 = vector.extract_strided_slice %346 {offsets = [0, 0], sizes = [2, 96], strides = [1, 1]} : vector<2x128xf32> to vector<2x96xf32>
    %cst_70 = arith.constant 5.000000e-01 : f32
    %348 = vector.broadcast %cst_70 : f32 to vector<2x96xf32>
    %349 = arith.mulf %347, %348 : vector<2x96xf32>
    %cst_71 = arith.constant 5.000000e-01 : f32
    %350 = vector.broadcast %cst_71 : f32 to vector<2x96xf32>
    %351 = arith.addf %349, %350 : vector<2x96xf32>
    %352 = vector.extract_strided_slice %351 {offsets = [0, 0], sizes = [2, 32], strides = [1, 1]} : vector<2x96xf32> to vector<2x32xf32>
    %353 = vector.extract_strided_slice %351 {offsets = [0, 32], sizes = [2, 32], strides = [1, 1]} : vector<2x96xf32> to vector<2x32xf32>
    %354 = vector.extract_strided_slice %351 {offsets = [0, 64], sizes = [2, 32], strides = [1, 1]} : vector<2x96xf32> to vector<2x32xf32>
    %355 = vector.extract_strided_slice %346 {offsets = [0, 96], sizes = [2, 32], strides = [1, 1]} : vector<2x128xf32> to vector<2x32xf32>
    %356 = arith.mulf %353, %340 : vector<2x32xf32>
    %357 = arith.mulf %352, %355 : vector<2x32xf32>
    %358 = arith.addf %356, %357 : vector<2x32xf32>
    %359 = math.tanh %358 : vector<2x32xf32>
    %360 = arith.mulf %354, %359 : vector<2x32xf32>
    %361 = vector.extract_strided_slice %232 {offsets = [14, 0], sizes = [2, 128], strides = [1, 1]} : vector<16x128xf32> to vector<2x128xf32>
    %cst_72 = arith.constant dense<0.000000e+00> : vector<2x128xf32>
    %362 = tpu.matmul %360, %3, %cst_72 {dimension_numbers = #tpu.dot_dimension_numbers<[1], [0], [0], [1], [0, 0, 1, 1], [], []>} : vector<2x32xf32>, vector<32x128xf32>, vector<2x128xf32> -> vector<2x128xf32>
    %363 = arith.addf %361, %362 : vector<2x128xf32>
    %364 = math.tanh %363 : vector<2x128xf32>
    %365 = vector.extract_strided_slice %364 {offsets = [0, 0], sizes = [2, 96], strides = [1, 1]} : vector<2x128xf32> to vector<2x96xf32>
    %cst_73 = arith.constant 5.000000e-01 : f32
    %366 = vector.broadcast %cst_73 : f32 to vector<2x96xf32>
    %367 = arith.mulf %365, %366 : vector<2x96xf32>
    %cst_74 = arith.constant 5.000000e-01 : f32
    %368 = vector.broadcast %cst_74 : f32 to vector<2x96xf32>
    %369 = arith.addf %367, %368 : vector<2x96xf32>
    %370 = vector.extract_strided_slice %369 {offsets = [0, 0], sizes = [2, 32], strides = [1, 1]} : vector<2x96xf32> to vector<2x32xf32>
    %371 = vector.extract_strided_slice %369 {offsets = [0, 32], sizes = [2, 32], strides = [1, 1]} : vector<2x96xf32> to vector<2x32xf32>
    %372 = vector.extract_strided_slice %369 {offsets = [0, 64], sizes = [2, 32], strides = [1, 1]} : vector<2x96xf32> to vector<2x32xf32>
    %373 = vector.extract_strided_slice %364 {offsets = [0, 96], sizes = [2, 32], strides = [1, 1]} : vector<2x128xf32> to vector<2x32xf32>
    %374 = arith.mulf %371, %358 : vector<2x32xf32>
    %375 = arith.mulf %370, %373 : vector<2x32xf32>
    %376 = arith.addf %374, %375 : vector<2x32xf32>
    %377 = math.tanh %376 : vector<2x32xf32>
    %378 = arith.mulf %372, %377 : vector<2x32xf32>
    %379 = vector.broadcast %6 : vector<1x32xf32> to vector<2x32xf32>
    %380 = arith.mulf %378, %379 : vector<2x32xf32>
    %cst_75 = arith.constant dense<0.000000e+00> : vector<2xf32>
    %381 = vector.multi_reduction <add>, %380, %cst_75 [1] : vector<2x32xf32> to vector<2xf32>
    %382 = vector.shape_cast %381 : vector<2xf32> to vector<2x1xf32>
    %383 = vector.broadcast %7 : vector<1x1xf32> to vector<2x1xf32>
    %384 = arith.addf %382, %383 : vector<2x1xf32>
    %cst_76 = arith.constant 5.000000e-01 : f32
    %385 = vector.broadcast %cst_76 : f32 to vector<2x1xf32>
    %386 = arith.mulf %385, %384 : vector<2x1xf32>
    %387 = math.tanh %386 : vector<2x1xf32>
    %cst_77 = arith.constant 5.000000e-01 : f32
    %388 = vector.broadcast %cst_77 : f32 to vector<2x1xf32>
    %389 = arith.mulf %388, %387 : vector<2x1xf32>
    %cst_78 = arith.constant 5.000000e-01 : f32
    %390 = vector.broadcast %cst_78 : f32 to vector<2x1xf32>
    %391 = arith.addf %389, %390 : vector<2x1xf32>
    %c0_79 = arith.constant 0 : index
    %c0_80 = arith.constant 0 : index
    %392 = vector.load %arg2[%c0_79, %c0_80] : memref<2x1xf32, #tpu.memory_space<vmem>>, vector<2x1xf32>
    tpu.vector_store %arg2[%c0_79, %c0_80], %391 {strides = array<i32>} : memref<2x1xf32, #tpu.memory_space<vmem>>, vector<2x1xf32>,
    return
  }
}

</mosaic_0001>

<llo_original>
// kernel: lstm_discriminator_forward.1
$region0: #{lstm_discriminator_forward.1}
  #allocation0 [shape = 'u32[]', space=smem, size = 0x4, offset = 0x4, fixed_abs, tag = 'smem constant byte address 0x4 - core index']
  #allocation1 [shape = 'u32[72,128]{1,0:T(1,128)}', space=vmem, size = 0x9000, scoped, tag = 'internal scratch']
  %s0 = inlined_call_operand.vmem [shape: f32[192,16], index: 0, kind: input, shape index: {}]
  %s1 = inlined_call_operand.vmem [shape: f32[120,128], index: 1, kind: input, shape index: {}]
  %s2 = inlined_call_operand.vmem [shape: f32[2,1], index: 2, kind: output, shape index: {}]
  %s3 = sld [smem:[#allocation0]]
  $region18: #{lstm_discriminator_forward.1} parent=0
    _
  %s5 = ssub.s32 1, %s3
  %s6 = scalar_select 0, %s5, %s3
  // Predicated region
  $region2: #{lstm_discriminator_forward.1} parent=0 // pred_check
    _
  $region3: #{lstm_discriminator_forward.1} parent=0 // pred_check_branch
    %8 = sbr.rel (0) target = $region5
  $region4: #{lstm_discriminator_forward.1} parent=0 // pred_region
    _
  $region5: #{lstm_discriminator_forward.1} parent=0 // pred_fallthru
    _
  // Predicated region
  $region6: #{lstm_discriminator_forward.1} parent=0 // pred_check
    _
  $region7: #{lstm_discriminator_forward.1} parent=0 // pred_check_branch
    %10 = sbr.rel (0) target = $region9
  $region8: #{lstm_discriminator_forward.1} parent=0 // pred_region
    _
  $region9: #{lstm_discriminator_forward.1} parent=0 // pred_fallthru
    _
  %v11 = vld [vmem:[%s1] sm:$0xff]
  %v12 = vld [vmem:[%s1 + $0x8] sm:$0xff]
  %v13 = vld [vmem:[%s1 + $0x10] sm:$0xff]
  %v14 = vld [vmem:[%s1 + $0x18] sm:$0xff]
  %v15 = vld [vmem:[%s1 + $0x20] sm:$0xff]
  %v16 = vld [vmem:[%s1 + $0x28] sm:$0xff]
  %v17 = vld [vmem:[%s1 + $0x30] sm:$0xff]
  %v18 = vld [vmem:[%s1 + $0x38] sm:$0xff]
  %v19 = vld [vmem:[%s1 + $0x40] sm:$0xff]
  %v20 = vld [vmem:[%s1 + $0x48] sm:$0xff]
  %v21 = vld [vmem:[%s1 + $0x50] sm:$0xff]
  %v22 = vld [vmem:[%s1 + $0x58] sm:$0xff]
  %v23 = vld [vmem:[%s1 + $0x60] sm:$0xff]
  %v24 = vld [vmem:[%s1 + $0x68] sm:$0xff]
  %v25 = vld [vmem:[%s1 + $0x70] sm:$0x1]
  %v26 = vld [vmem:[%s1 + $0x71] sm:$0x1]
  %v27 = vld [vmem:[%s1 + $0x72] sm:$0x1]
  %v28 = vld [vmem:[%s1 + $0x73] sm:$0x1]
  %v29 = vld [vmem:[%s0] sm:$0xff]
  %v30 = vld [vmem:[%s0 + $0x8] sm:$0xff]
  %v31 = vld [vmem:[%s0 + $0x10] sm:$0xff]
  %v32 = vld [vmem:[%s0 + $0x18] sm:$0xff]
  %v33 = vld [vmem:[%s0 + $0x20] sm:$0xff]
  %v34 = vld [vmem:[%s0 + $0x28] sm:$0xff]
  %v35 = vld [vmem:[%s0 + $0x30] sm:$0xff]
  %v36 = vld [vmem:[%s0 + $0x38] sm:$0xff]
  %v37 = vld [vmem:[%s0 + $0x40] sm:$0xff]
  %v38 = vld [vmem:[%s0 + $0x48] sm:$0xff]
  %v39 = vld [vmem:[%s0 + $0x50] sm:$0xff]
  %v40 = vld [vmem:[%s0 + $0x58] sm:$0xff]
  %v41 = vld [vmem:[%s0 + $0x60] sm:$0xff]
  %v42 = vld [vmem:[%s0 + $0x68] sm:$0xff]
  %v43 = vld [vmem:[%s0 + $0x70] sm:$0xff]
  %v44 = vld [vmem:[%s0 + $0x78] sm:$0xff]
  %v45 = vld [vmem:[%s0 + $0x80] sm:$0xff]
  %v46 = vld [vmem:[%s0 + $0x88] sm:$0xff]
  %v47 = vld [vmem:[%s0 + $0x90] sm:$0xff]
  %v48 = vld [vmem:[%s0 + $0x98] sm:$0xff]
  %v49 = vld [vmem:[%s0 + $0xa0] sm:$0xff]
  %v50 = vld [vmem:[%s0 + $0xa8] sm:$0xff]
  %v51 = vld [vmem:[%s0 + $0xb0] sm:$0xff]
  %v52 = vld [vmem:[%s0 + $0xb8] sm:$0xff]
  %v53 = vperm.slane %v25, 0
  %vm54 = vcmask 130048
  %v56 = vsel %vm54, %v29, 0
  %v59 = vsel %vm54, %v30, 0
  %v62 = vsel %vm54, %v31, 0
  %v65 = vsel %vm54, %v32, 0
  %v68 = vsel %vm54, %v33, 0
  %v71 = vsel %vm54, %v34, 0
  %v74 = vsel %vm54, %v35, 0
  %v77 = vsel %vm54, %v36, 0
  %v80 = vsel %vm54, %v37, 0
  %v83 = vsel %vm54, %v38, 0
  %v86 = vsel %vm54, %v39, 0
  %v89 = vsel %vm54, %v40, 0
  %v92 = vsel %vm54, %v41, 0
  %v95 = vsel %vm54, %v42, 0
  %v98 = vsel %vm54, %v43, 0
  %v101 = vsel %vm54, %v44, 0
  %v104 = vsel %vm54, %v45, 0
  %v107 = vsel %vm54, %v46, 0
  %v110 = vsel %vm54, %v47, 0
  %v113 = vsel %vm54, %v48, 0
  %v116 = vsel %vm54, %v49, 0
  %v119 = vsel %vm54, %v50, 0
  %v122 = vsel %vm54, %v51, 0
  %v125 = vsel %vm54, %v52, 0
  %127 = vmatpush.msra.mxu0 0.0
  %128 = vmatpush.msra.mxu0 0.0
  %129 = vmatpush.msra.mxu0 0.0
  %130 = vmatpush.msra.mxu0 0.0
  %131 = vmatpush.msra.mxu0 0.0
  %132 = vmatpush.msra.mxu0 0.0
  %133 = vmatpush.msra.mxu0 0.0
  %134 = vmatpush.msra.mxu0 0.0
  %135 = vmatpush.msra.mxu0 0.0
  %136 = vmatpush.msra.mxu0 0.0
  %137 = vmatpush.msra.mxu0 0.0
  %138 = vmatpush.msra.mxu0 0.0
  %139 = vmatpush.msra.mxu0 0.0
  %140 = vmatpush.msra.mxu0 0.0
  %141 = vmatpush.msra.mxu0 %v12
  %142 = vmatpush.msra.mxu0 %v11
  %143 = vmatmul.f32.gmra.mxu0 %v56
  %v144 = vpop.f32.mrf.mxu0
  %v145 = vadd.f32 %v53, %v144
  %146 = vmatmul.f32.gmra.mxu0 %v59
  %v147 = vpop.f32.mrf.mxu0
  %v148 = vadd.f32 %v53, %v147
  %149 = vmatmul.f32.gmra.mxu0 %v62
  %v150 = vpop.f32.mrf.mxu0
  %v151 = vadd.f32 %v53, %v150
  %152 = vmatmul.f32.gmra.mxu0 %v65
  %v153 = vpop.f32.mrf.mxu0
  %v154 = vadd.f32 %v53, %v153
  %155 = vmatmul.f32.gmra.mxu0 %v68
  %v156 = vpop.f32.mrf.mxu0
  %v157 = vadd.f32 %v53, %v156
  %158 = vmatmul.f32.gmra.mxu0 %v71
  %v159 = vpop.f32.mrf.mxu0
  %v160 = vadd.f32 %v53, %v159
  %161 = vmatmul.f32.gmra.mxu0 %v74
  %v162 = vpop.f32.mrf.mxu0
  %v163 = vadd.f32 %v53, %v162
  %164 = vmatmul.f32.gmra.mxu0 %v77
  %v165 = vpop.f32.mrf.mxu0
  %v166 = vadd.f32 %v53, %v165
  %167 = vmatmul.f32.gmra.mxu0 %v80
  %v168 = vpop.f32.mrf.mxu0
  %v169 = vadd.f32 %v53, %v168
  %170 = vmatmul.f32.gmra.mxu0 %v83
  %v171 = vpop.f32.mrf.mxu0
  %v172 = vadd.f32 %v53, %v171
  %173 = vmatmul.f32.gmra.mxu0 %v86
  %v174 = vpop.f32.mrf.mxu0
  %v175 = vadd.f32 %v53, %v174
  %176 = vmatmul.f32.gmra.mxu0 %v89
  %v177 = vpop.f32.mrf.mxu0
  %v178 = vadd.f32 %v53, %v177
  %179 = vmatmul.f32.gmra.mxu0 %v92
  %v180 = vpop.f32.mrf.mxu0
  %v181 = vadd.f32 %v53, %v180
  %182 = vmatmul.f32.gmra.mxu0 %v95
  %v183 = vpop.f32.mrf.mxu0
  %v184 = vadd.f32 %v53, %v183
  %185 = vmatmul.f32.gmra.mxu0 %v98
  %v186 = vpop.f32.mrf.mxu0
  %v187 = vadd.f32 %v53, %v186
  %188 = vmatmul.f32.gmra.mxu0 %v101
  %v189 = vpop.f32.mrf.mxu0
  %v190 = vadd.f32 %v53, %v189
  %191 = vmatmul.f32.gmra.mxu0 %v104
  %v192 = vpop.f32.mrf.mxu0
  %v193 = vadd.f32 %v53, %v192
  %194 = vmatmul.f32.gmra.mxu0 %v107
  %v195 = vpop.f32.mrf.mxu0
  %v196 = vadd.f32 %v53, %v195
  %197 = vmatmul.f32.gmra.mxu0 %v110
  %v198 = vpop.f32.mrf.mxu0
  %v199 = vadd.f32 %v53, %v198
  %200 = vmatmul.f32.gmra.mxu0 %v113
  %v201 = vpop.f32.mrf.mxu0
  %v202 = vadd.f32 %v53, %v201
  %203 = vmatmul.f32.gmra.mxu0 %v116
  %v204 = vpop.f32.mrf.mxu0
  %v205 = vadd.f32 %v53, %v204
  %206 = vmatmul.f32.gmra.mxu0 %v119
  %v207 = vpop.f32.mrf.mxu0
  %v208 = vadd.f32 %v53, %v207
  %209 = vmatmul.f32.gmra.mxu0 %v122
  %v210 = vpop.f32.mrf.mxu0
  %v211 = vadd.f32 %v53, %v210
  %212 = vmatmul.f32.gmra.mxu0 %v125
  %v213 = vpop.f32.mrf.mxu0
  %v214 = vadd.f32 %v53, %v213
  %215 = vdwg.mxu0
  %vm216 = vcmask 261120
  %v218 = vsel %vm216, 0.0, 0
  %220 = vmatpush.msra.mxu0 0.0
  %221 = vmatpush.msra.mxu0 0.0
  %222 = vmatpush.msra.mxu0 0.0
  %223 = vmatpush.msra.mxu0 0.0
  %224 = vmatpush.msra.mxu0 0.0
  %225 = vmatpush.msra.mxu0 0.0
  %226 = vmatpush.msra.mxu0 0.0
  %227 = vmatpush.msra.mxu0 0.0
  %228 = vmatpush.msra.mxu0 0.0
  %229 = vmatpush.msra.mxu0 0.0
  %230 = vmatpush.msra.mxu0 0.0
  %231 = vmatpush.msra.mxu0 0.0
  %232 = vmatpush.msra.mxu0 %v16
  %233 = vmatpush.msra.mxu0 %v15
  %234 = vmatpush.msra.mxu0 %v14
  %235 = vmatpush.msra.mxu0 %v13
  %236 = vmatmul.f32.gmra.mxu0 %v218
  %v237 = vpop.f32.mrf.mxu0
  %v238 = vadd.f32 0.0, %v237
  %239 = vmatmul.f32.gmra.mxu0 %v218
  %v240 = vpop.f32.mrf.mxu0
  %v241 = vadd.f32 0.0, %v240
  %242 = vdwg.mxu0
  %v243 = vadd.f32 %v145, %v238
  %v244 = vadd.f32 %v148, %v241
  %v245 = vtanh.pop %v243
  %v246 = vtanh.pop %v244
  %v247 = vmul.f32 %v245, 0.5
  %v248 = vmul.f32 %v246, 0.5
  %v249 = vadd.f32 %v247, 0.5
  %v250 = vadd.f32 %v248, 0.5
  %v251 = vmul.f32 %v249, 0.0
  %v252 = vmul.f32 %v250, 0.0
  %255 = vrot.lane.b32.xlu0 %v245, 32
  %v256 = vpop.permute.xlu0 %255
  %257 = vrot.lane.b32.xlu0 %v246, 32
  %v258 = vpop.permute.xlu0 %257
  %v261 = vmul.f32 %v249, %v256
  %v262 = vmul.f32 %v250, %v258
  %265 = vrot.lane.b32.xlu0 %v261, 32
  %v266 = vpop.permute.xlu0 %265
  %267 = vrot.lane.b32.xlu0 %v262, 32
  %v268 = vpop.permute.xlu0 %267
  %v271 = vadd.f32 %v251, %v266
  %v272 = vadd.f32 %v252, %v268
  %v273 = vtanh.pop %v271
  %v274 = vtanh.pop %v272
  %277 = vrot.lane.b32.xlu0 %v273, 32
  %v278 = vpop.permute.xlu0 %277
  %279 = vrot.lane.b32.xlu0 %v274, 32
  %v280 = vpop.permute.xlu0 %279
  %v283 = vmul.f32 %v249, %v278
  %v284 = vmul.f32 %v250, %v280
  %287 = vrot.lane.b32.xlu0 %v283, 64
  %v288 = vpop.permute.xlu0 %287
  %289 = vrot.lane.b32.xlu0 %v284, 64
  %v290 = vpop.permute.xlu0 %289
  %v291 = vsel %vm216, %v288, 0
  %v293 = vsel %vm216, %v290, 0
  %295 = vmatpush.msra.mxu0 0.0
  %296 = vmatpush.msra.mxu0 0.0
  %297 = vmatpush.msra.mxu0 0.0
  %298 = vmatpush.msra.mxu0 0.0
  %299 = vmatpush.msra.mxu0 0.0
  %300 = vmatpush.msra.mxu0 0.0
  %301 = vmatpush.msra.mxu0 0.0
  %302 = vmatpush.msra.mxu0 0.0
  %303 = vmatpush.msra.mxu0 0.0
  %304 = vmatpush.msra.mxu0 0.0
  %305 = vmatpush.msra.mxu0 0.0
  %306 = vmatpush.msra.mxu0 0.0
  %307 = vmatpush.msra.mxu0 %v16
  %308 = vmatpush.msra.mxu0 %v15
  %309 = vmatpush.msra.mxu0 %v14
  %310 = vmatpush.msra.mxu0 %v13
  %311 = vmatmul.f32.gmra.mxu0 %v291
  %v312 = vpop.f32.mrf.mxu0
  %v313 = vadd.f32 0.0, %v312
  %314 = vmatmul.f32.gmra.mxu0 %v293
  %v315 = vpop.f32.mrf.mxu0
  %v316 = vadd.f32 0.0, %v315
  %317 = vdwg.mxu0
  %v318 = vadd.f32 %v151, %v313
  %v319 = vadd.f32 %v154, %v316
  %v320 = vtanh.pop %v318
  %v321 = vtanh.pop %v319
  %v322 = vmul.f32 %v320, 0.5
  %v323 = vmul.f32 %v321, 0.5
  %v324 = vadd.f32 %v322, 0.5
  %v325 = vadd.f32 %v323, 0.5
  %v326 = vmul.f32 %v324, %v271
  %v327 = vmul.f32 %v325, %v272
  %330 = vrot.lane.b32.xlu0 %v320, 32
  %v331 = vpop.permute.xlu0 %330
  %332 = vrot.lane.b32.xlu0 %v321, 32
  %v333 = vpop.permute.xlu0 %332
  %v336 = vmul.f32 %v324, %v331
  %v337 = vmul.f32 %v325, %v333
  %340 = vrot.lane.b32.xlu0 %v336, 32
  %v341 = vpop.permute.xlu0 %340
  %342 = vrot.lane.b32.xlu0 %v337, 32
  %v343 = vpop.permute.xlu0 %342
  %v346 = vadd.f32 %v326, %v341
  %v347 = vadd.f32 %v327, %v343
  %v348 = vtanh.pop %v346
  %v349 = vtanh.pop %v347
  %352 = vrot.lane.b32.xlu0 %v348, 32
  %v353 = vpop.permute.xlu0 %352
  %354 = vrot.lane.b32.xlu0 %v349, 32
  %v355 = vpop.permute.xlu0 %354
  %v358 = vmul.f32 %v324, %v353
  %v359 = vmul.f32 %v325, %v355
  %362 = vrot.lane.b32.xlu0 %v358, 64
  %v363 = vpop.permute.xlu0 %362
  %364 = vrot.lane.b32.xlu0 %v359, 64
  %v365 = vpop.permute.xlu0 %364
  %v366 = vsel %vm216, %v363, 0
  %v368 = vsel %vm216, %v365, 0
  %370 = vmatpush.msra.mxu0 0.0
  %371 = vmatpush.msra.mxu0 0.0
  %372 = vmatpush.msra.mxu0 0.0
  %373 = vmatpush.msra.mxu0 0.0
  %374 = vmatpush.msra.mxu0 0.0
  %375 = vmatpush.msra.mxu0 0.0
  %376 = vmatpush.msra.mxu0 0.0
  %377 = vmatpush.msra.mxu0 0.0
  %378 = vmatpush.msra.mxu0 0.0
  %379 = vmatpush.msra.mxu0 0.0
  %380 = vmatpush.msra.mxu0 0.0
  %381 = vmatpush.msra.mxu0 0.0
  %382 = vmatpush.msra.mxu0 %v16
  %383 = vmatpush.msra.mxu0 %v15
  %384 = vmatpush.msra.mxu0 %v14
  %385 = vmatpush.msra.mxu0 %v13
  %386 = vmatmul.f32.gmra.mxu0 %v366
  %v387 = vpop.f32.mrf.mxu0
  %v388 = vadd.f32 0.0, %v387
  %389 = vmatmul.f32.gmra.mxu0 %v368
  %v390 = vpop.f32.mrf.mxu0
  %v391 = vadd.f32 0.0, %v390
  %392 = vdwg.mxu0
  %v393 = vadd.f32 %v157, %v388
  %v394 = vadd.f32 %v160, %v391
  %v395 = vtanh.pop %v393
  %v396 = vtanh.pop %v394
  %v397 = vmul.f32 %v395, 0.5
  %v398 = vmul.f32 %v396, 0.5
  %v399 = vadd.f32 %v397, 0.5
  %v400 = vadd.f32 %v398, 0.5
  %v401 = vmul.f32 %v399, %v346
  %v402 = vmul.f32 %v400, %v347
  %405 = vrot.lane.b32.xlu0 %v395, 32
  %v406 = vpop.permute.xlu0 %405
  %407 = vrot.lane.b32.xlu0 %v396, 32
  %v408 = vpop.permute.xlu0 %407
  %v411 = vmul.f32 %v399, %v406
  %v412 = vmul.f32 %v400, %v408
  %415 = vrot.lane.b32.xlu0 %v411, 32
  %v416 = vpop.permute.xlu0 %415
  %417 = vrot.lane.b32.xlu0 %v412, 32
  %v418 = vpop.permute.xlu0 %417
  %v421 = vadd.f32 %v401, %v416
  %v422 = vadd.f32 %v402, %v418
  %v423 = vtanh.pop %v421
  %v424 = vtanh.pop %v422
  %427 = vrot.lane.b32.xlu0 %v423, 32
  %v428 = vpop.permute.xlu0 %427
  %429 = vrot.lane.b32.xlu0 %v424, 32
  %v430 = vpop.permute.xlu0 %429
  %v433 = vmul.f32 %v399, %v428
  %v434 = vmul.f32 %v400, %v430
  %437 = vrot.lane.b32.xlu0 %v433, 64
  %v438 = vpop.permute.xlu0 %437
  %439 = vrot.lane.b32.xlu0 %v434, 64
  %v440 = vpop.permute.xlu0 %439
  %v441 = vsel %vm216, %v438, 0
  %v443 = vsel %vm216, %v440, 0
  %445 = vmatpush.msra.mxu0 0.0
  %446 = vmatpush.msra.mxu0 0.0
  %447 = vmatpush.msra.mxu0 0.0
  %448 = vmatpush.msra.mxu0 0.0
  %449 = vmatpush.msra.mxu0 0.0
  %450 = vmatpush.msra.mxu0 0.0
  %451 = vmatpush.msra.mxu0 0.0
  %452 = vmatpush.msra.mxu0 0.0
  %453 = vmatpush.msra.mxu0 0.0
  %454 = vmatpush.msra.mxu0 0.0
  %455 = vmatpush.msra.mxu0 0.0
  %456 = vmatpush.msra.mxu0 0.0
  %457 = vmatpush.msra.mxu0 %v16
  %458 = vmatpush.msra.mxu0 %v15
  %459 = vmatpush.msra.mxu0 %v14
  %460 = vmatpush.msra.mxu0 %v13
  %461 = vmatmul.f32.gmra.mxu0 %v441
  %v462 = vpop.f32.mrf.mxu0
  %v463 = vadd.f32 0.0, %v462
  %464 = vmatmul.f32.gmra.mxu0 %v443
  %v465 = vpop.f32.mrf.mxu0
  %v466 = vadd.f32 0.0, %v465
  %467 = vdwg.mxu0
  %v468 = vadd.f32 %v163, %v463
  %v469 = vadd.f32 %v166, %v466
  %v470 = vtanh.pop %v468
  %v471 = vtanh.pop %v469
  %v472 = vmul.f32 %v470, 0.5
  %v473 = vmul.f32 %v471, 0.5
  %v474 = vadd.f32 %v472, 0.5
  %v475 = vadd.f32 %v473, 0.5
  %v476 = vmul.f32 %v474, %v421
  %v477 = vmul.f32 %v475, %v422
  %480 = vrot.lane.b32.xlu0 %v470, 32
  %v481 = vpop.permute.xlu0 %480
  %482 = vrot.lane.b32.xlu0 %v471, 32
  %v483 = vpop.permute.xlu0 %482
  %v486 = vmul.f32 %v474, %v481
  %v487 = vmul.f32 %v475, %v483
  %490 = vrot.lane.b32.xlu0 %v486, 32
  %v491 = vpop.permute.xlu0 %490
  %492 = vrot.lane.b32.xlu0 %v487, 32
  %v493 = vpop.permute.xlu0 %492
  %v496 = vadd.f32 %v476, %v491
  %v497 = vadd.f32 %v477, %v493
  %v498 = vtanh.pop %v496
  %v499 = vtanh.pop %v497
  %502 = vrot.lane.b32.xlu0 %v498, 32
  %v503 = vpop.permute.xlu0 %502
  %504 = vrot.lane.b32.xlu0 %v499, 32
  %v505 = vpop.permute.xlu0 %504
  %v508 = vmul.f32 %v474, %v503
  %v509 = vmul.f32 %v475, %v505
  %512 = vrot.lane.b32.xlu0 %v508, 64
  %v513 = vpop.permute.xlu0 %512
  %514 = vrot.lane.b32.xlu0 %v509, 64
  %v515 = vpop.permute.xlu0 %514
  %v516 = vsel %vm216, %v513, 0
  %v518 = vsel %vm216, %v515, 0
  %520 = vmatpush.msra.mxu0 0.0
  %521 = vmatpush.msra.mxu0 0.0
  %522 = vmatpush.msra.mxu0 0.0
  %523 = vmatpush.msra.mxu0 0.0
  %524 = vmatpush.msra.mxu0 0.0
  %525 = vmatpush.msra.mxu0 0.0
  %526 = vmatpush.msra.mxu0 0.0
  %527 = vmatpush.msra.mxu0 0.0
  %528 = vmatpush.msra.mxu0 0.0
  %529 = vmatpush.msra.mxu0 0.0
  %530 = vmatpush.msra.mxu0 0.0
  %531 = vmatpush.msra.mxu0 0.0
  %532 = vmatpush.msra.mxu0 %v16
  %533 = vmatpush.msra.mxu0 %v15
  %534 = vmatpush.msra.mxu0 %v14
  %535 = vmatpush.msra.mxu0 %v13
  %536 = vmatmul.f32.gmra.mxu0 %v516
  %v537 = vpop.f32.mrf.mxu0
  %v538 = vadd.f32 0.0, %v537
  %539 = vmatmul.f32.gmra.mxu0 %v518
  %v540 = vpop.f32.mrf.mxu0
  %v541 = vadd.f32 0.0, %v540
  %542 = vdwg.mxu0
  %v543 = vadd.f32 %v169, %v538
  %v544 = vadd.f32 %v172, %v541
  %v545 = vtanh.pop %v543
  %v546 = vtanh.pop %v544
  %v547 = vmul.f32 %v545, 0.5
  %v548 = vmul.f32 %v546, 0.5
  %v549 = vadd.f32 %v547, 0.5
  %v550 = vadd.f32 %v548, 0.5
  %v551 = vmul.f32 %v549, %v496
  %v552 = vmul.f32 %v550, %v497
  %555 = vrot.lane.b32.xlu0 %v545, 32
  %v556 = vpop.permute.xlu0 %555
  %557 = vrot.lane.b32.xlu0 %v546, 32
  %v558 = vpop.permute.xlu0 %557
  %v561 = vmul.f32 %v549, %v556
  %v562 = vmul.f32 %v550, %v558
  %565 = vrot.lane.b32.xlu0 %v561, 32
  %v566 = vpop.permute.xlu0 %565
  %567 = vrot.lane.b32.xlu0 %v562, 32
  %v568 = vpop.permute.xlu0 %567
  %v571 = vadd.f32 %v551, %v566
  %v572 = vadd.f32 %v552, %v568
  %v573 = vtanh.pop %v571
  %v574 = vtanh.pop %v572
  %577 = vrot.lane.b32.xlu0 %v573, 32
  %v578 = vpop.permute.xlu0 %577
  %579 = vrot.lane.b32.xlu0 %v574, 32
  %v580 = vpop.permute.xlu0 %579
  %v583 = vmul.f32 %v549, %v578
  %v584 = vmul.f32 %v550, %v580
  %587 = vrot.lane.b32.xlu0 %v583, 64
  %v588 = vpop.permute.xlu0 %587
  %589 = vrot.lane.b32.xlu0 %v584, 64
  %v590 = vpop.permute.xlu0 %589
  %v591 = vsel %vm216, %v588, 0
  %v593 = vsel %vm216, %v590, 0
  %595 = vmatpush.msra.mxu0 0.0
  %596 = vmatpush.msra.mxu0 0.0
  %597 = vmatpush.msra.mxu0 0.0
  %598 = vmatpush.msra.mxu0 0.0
  %599 = vmatpush.msra.mxu0 0.0
  %600 = vmatpush.msra.mxu0 0.0
  %601 = vmatpush.msra.mxu0 0.0
  %602 = vmatpush.msra.mxu0 0.0
  %603 = vmatpush.msra.mxu0 0.0
  %604 = vmatpush.msra.mxu0 0.0
  %605 = vmatpush.msra.mxu0 0.0
  %606 = vmatpush.msra.mxu0 0.0
  %607 = vmatpush.msra.mxu0 %v16
  %608 = vmatpush.msra.mxu0 %v15
  %609 = vmatpush.msra.mxu0 %v14
  %610 = vmatpush.msra.mxu0 %v13
  %611 = vmatmul.f32.gmra.mxu0 %v591
  %v612 = vpop.f32.mrf.mxu0
  %v613 = vadd.f32 0.0, %v612
  %614 = vmatmul.f32.gmra.mxu0 %v593
  %v615 = vpop.f32.mrf.mxu0
  %v616 = vadd.f32 0.0, %v615
  %617 = vdwg.mxu0
  %v618 = vadd.f32 %v175, %v613
  %v619 = vadd.f32 %v178, %v616
  %v620 = vtanh.pop %v618
  %v621 = vtanh.pop %v619
  %v622 = vmul.f32 %v620, 0.5
  %v623 = vmul.f32 %v621, 0.5
  %v624 = vadd.f32 %v622, 0.5
  %v625 = vadd.f32 %v623, 0.5
  %v626 = vmul.f32 %v624, %v571
  %v627 = vmul.f32 %v625, %v572
  %630 = vrot.lane.b32.xlu0 %v620, 32
  %v631 = vpop.permute.xlu0 %630
  %632 = vrot.lane.b32.xlu0 %v621, 32
  %v633 = vpop.permute.xlu0 %632
  %v636 = vmul.f32 %v624, %v631
  %v637 = vmul.f32 %v625, %v633
  %640 = vrot.lane.b32.xlu0 %v636, 32
  %v641 = vpop.permute.xlu0 %640
  %642 = vrot.lane.b32.xlu0 %v637, 32
  %v643 = vpop.permute.xlu0 %642
  %v646 = vadd.f32 %v626, %v641
  %v647 = vadd.f32 %v627, %v643
  %v648 = vtanh.pop %v646
  %v649 = vtanh.pop %v647
  %652 = vrot.lane.b32.xlu0 %v648, 32
  %v653 = vpop.permute.xlu0 %652
  %654 = vrot.lane.b32.xlu0 %v649, 32
  %v655 = vpop.permute.xlu0 %654
  %v658 = vmul.f32 %v624, %v653
  %v659 = vmul.f32 %v625, %v655
  %662 = vrot.lane.b32.xlu0 %v658, 64
  %v663 = vpop.permute.xlu0 %662
  %664 = vrot.lane.b32.xlu0 %v659, 64
  %v665 = vpop.permute.xlu0 %664
  %v666 = vsel %vm216, %v663, 0
  %v668 = vsel %vm216, %v665, 0
  %670 = vmatpush.msra.mxu0 0.0
  %671 = vmatpush.msra.mxu0 0.0
  %672 = vmatpush.msra.mxu0 0.0
  %673 = vmatpush.msra.mxu0 0.0
  %674 = vmatpush.msra.mxu0 0.0
  %675 = vmatpush.msra.mxu0 0.0
  %676 = vmatpush.msra.mxu0 0.0
  %677 = vmatpush.msra.mxu0 0.0
  %678 = vmatpush.msra.mxu0 0.0
  %679 = vmatpush.msra.mxu0 0.0
  %680 = vmatpush.msra.mxu0 0.0
  %681 = vmatpush.msra.mxu0 0.0
  %682 = vmatpush.msra.mxu0 %v16
  %683 = vmatpush.msra.mxu0 %v15
  %684 = vmatpush.msra.mxu0 %v14
  %685 = vmatpush.msra.mxu0 %v13
  %686 = vmatmul.f32.gmra.mxu0 %v666
  %v687 = vpop.f32.mrf.mxu0
  %v688 = vadd.f32 0.0, %v687
  %689 = vmatmul.f32.gmra.mxu0 %v668
  %v690 = vpop.f32.mrf.mxu0
  %v691 = vadd.f32 0.0, %v690
  %692 = vdwg.mxu0
  %v693 = vadd.f32 %v181, %v688
  %v694 = vadd.f32 %v184, %v691
  %v695 = vtanh.pop %v693
  %v696 = vtanh.pop %v694
  %v697 = vmul.f32 %v695, 0.5
  %v698 = vmul.f32 %v696, 0.5
  %v699 = vadd.f32 %v697, 0.5
  %v700 = vadd.f32 %v698, 0.5
  %v701 = vmul.f32 %v699, %v646
  %v702 = vmul.f32 %v700, %v647
  %705 = vrot.lane.b32.xlu0 %v695, 32
  %v706 = vpop.permute.xlu0 %705
  %707 = vrot.lane.b32.xlu0 %v696, 32
  %v708 = vpop.permute.xlu0 %707
  %v711 = vmul.f32 %v699, %v706
  %v712 = vmul.f32 %v700, %v708
  %715 = vrot.lane.b32.xlu0 %v711, 32
  %v716 = vpop.permute.xlu0 %715
  %717 = vrot.lane.b32.xlu0 %v712, 32
  %v718 = vpop.permute.xlu0 %717
  %v721 = vadd.f32 %v701, %v716
  %v722 = vadd.f32 %v702, %v718
  %v723 = vtanh.pop %v721
  %v724 = vtanh.pop %v722
  %727 = vrot.lane.b32.xlu0 %v723, 32
  %v728 = vpop.permute.xlu0 %727
  %729 = vrot.lane.b32.xlu0 %v724, 32
  %v730 = vpop.permute.xlu0 %729
  %v733 = vmul.f32 %v699, %v728
  %v734 = vmul.f32 %v700, %v730
  %737 = vrot.lane.b32.xlu0 %v733, 64
  %v738 = vpop.permute.xlu0 %737
  %739 = vrot.lane.b32.xlu0 %v734, 64
  %v740 = vpop.permute.xlu0 %739
  %v741 = vsel %vm216, %v738, 0
  %v743 = vsel %vm216, %v740, 0
  %745 = vmatpush.msra.mxu0 0.0
  %746 = vmatpush.msra.mxu0 0.0
  %747 = vmatpush.msra.mxu0 0.0
  %748 = vmatpush.msra.mxu0 0.0
  %749 = vmatpush.msra.mxu0 0.0
  %750 = vmatpush.msra.mxu0 0.0
  %751 = vmatpush.msra.mxu0 0.0
  %752 = vmatpush.msra.mxu0 0.0
  %753 = vmatpush.msra.mxu0 0.0
  %754 = vmatpush.msra.mxu0 0.0
  %755 = vmatpush.msra.mxu0 0.0
  %756 = vmatpush.msra.mxu0 0.0
  %757 = vmatpush.msra.mxu0 %v16
  %758 = vmatpush.msra.mxu0 %v15
  %759 = vmatpush.msra.mxu0 %v14
  %760 = vmatpush.msra.mxu0 %v13
  %761 = vmatmul.f32.gmra.mxu0 %v741
  %v762 = vpop.f32.mrf.mxu0
  %v763 = vadd.f32 0.0, %v762
  %764 = vmatmul.f32.gmra.mxu0 %v743
  %v765 = vpop.f32.mrf.mxu0
  %v766 = vadd.f32 0.0, %v765
  %767 = vdwg.mxu0
  %v768 = vadd.f32 %v187, %v763
  %v769 = vadd.f32 %v190, %v766
  %v770 = vtanh.pop %v768
  %v771 = vtanh.pop %v769
  %v772 = vmul.f32 %v770, 0.5
  %v773 = vmul.f32 %v771, 0.5
  %v774 = vadd.f32 %v772, 0.5
  %v775 = vadd.f32 %v773, 0.5
  %v776 = vmul.f32 %v774, %v721
  %v777 = vmul.f32 %v775, %v722
  %780 = vrot.lane.b32.xlu0 %v770, 32
  %v781 = vpop.permute.xlu0 %780
  %782 = vrot.lane.b32.xlu0 %v771, 32
  %v783 = vpop.permute.xlu0 %782
  %v786 = vmul.f32 %v774, %v781
  %v787 = vmul.f32 %v775, %v783
  %790 = vrot.lane.b32.xlu0 %v786, 32
  %v791 = vpop.permute.xlu0 %790
  %792 = vrot.lane.b32.xlu0 %v787, 32
  %v793 = vpop.permute.xlu0 %792
  %v796 = vadd.f32 %v776, %v791
  %v797 = vadd.f32 %v777, %v793
  %v798 = vtanh.pop %v796
  %v799 = vtanh.pop %v797
  %802 = vrot.lane.b32.xlu0 %v798, 32
  %v803 = vpop.permute.xlu0 %802
  %804 = vrot.lane.b32.xlu0 %v799, 32
  %v805 = vpop.permute.xlu0 %804
  %v808 = vmul.f32 %v774, %v803
  %v809 = vmul.f32 %v775, %v805
  %812 = vrot.lane.b32.xlu0 %v808, 64
  %v813 = vpop.permute.xlu0 %812
  %814 = vrot.lane.b32.xlu0 %v809, 64
  %v815 = vpop.permute.xlu0 %814
  %v816 = vsel %vm216, %v813, 0
  %v818 = vsel %vm216, %v815, 0
  %820 = vmatpush.msra.mxu0 0.0
  %821 = vmatpush.msra.mxu0 0.0
  %822 = vmatpush.msra.mxu0 0.0
  %823 = vmatpush.msra.mxu0 0.0
  %824 = vmatpush.msra.mxu0 0.0
  %825 = vmatpush.msra.mxu0 0.0
  %826 = vmatpush.msra.mxu0 0.0
  %827 = vmatpush.msra.mxu0 0.0
  %828 = vmatpush.msra.mxu0 0.0
  %829 = vmatpush.msra.mxu0 0.0
  %830 = vmatpush.msra.mxu0 0.0
  %831 = vmatpush.msra.mxu0 0.0
  %832 = vmatpush.msra.mxu0 %v16
  %833 = vmatpush.msra.mxu0 %v15
  %834 = vmatpush.msra.mxu0 %v14
  %835 = vmatpush.msra.mxu0 %v13
  %836 = vmatmul.f32.gmra.mxu0 %v816
  %v837 = vpop.f32.mrf.mxu0
  %v838 = vadd.f32 0.0, %v837
  %839 = vmatmul.f32.gmra.mxu0 %v818
  %v840 = vpop.f32.mrf.mxu0
  %v841 = vadd.f32 0.0, %v840
  %842 = vdwg.mxu0
  %v843 = vadd.f32 %v193, %v838
  %v844 = vadd.f32 %v196, %v841
  %v845 = vtanh.pop %v843
  %v846 = vtanh.pop %v844
  %v847 = vmul.f32 %v845, 0.5
  %v848 = vmul.f32 %v846, 0.5
  %v849 = vadd.f32 %v847, 0.5
  %v850 = vadd.f32 %v848, 0.5
  %v851 = vmul.f32 %v849, %v796
  %v852 = vmul.f32 %v850, %v797
  %855 = vrot.lane.b32.xlu0 %v845, 32
  %v856 = vpop.permute.xlu0 %855
  %857 = vrot.lane.b32.xlu0 %v846, 32
  %v858 = vpop.permute.xlu0 %857
  %v861 = vmul.f32 %v849, %v856
  %v862 = vmul.f32 %v850, %v858
  %865 = vrot.lane.b32.xlu0 %v861, 32
  %v866 = vpop.permute.xlu0 %865
  %867 = vrot.lane.b32.xlu0 %v862, 32
  %v868 = vpop.permute.xlu0 %867
  %v871 = vadd.f32 %v851, %v866
  %v872 = vadd.f32 %v852, %v868
  %v873 = vtanh.pop %v871
  %v874 = vtanh.pop %v872
  %877 = vrot.lane.b32.xlu0 %v873, 32
  %v878 = vpop.permute.xlu0 %877
  %879 = vrot.lane.b32.xlu0 %v874, 32
  %v880 = vpop.permute.xlu0 %879
  %v883 = vmul.f32 %v849, %v878
  %v884 = vmul.f32 %v850, %v880
  %887 = vrot.lane.b32.xlu0 %v883, 64
  %v888 = vpop.permute.xlu0 %887
  %889 = vrot.lane.b32.xlu0 %v884, 64
  %v890 = vpop.permute.xlu0 %889
  %v891 = vsel %vm216, %v888, 0
  %v893 = vsel %vm216, %v890, 0
  %895 = vmatpush.msra.mxu0 0.0
  %896 = vmatpush.msra.mxu0 0.0
  %897 = vmatpush.msra.mxu0 0.0
  %898 = vmatpush.msra.mxu0 0.0
  %899 = vmatpush.msra.mxu0 0.0
  %900 = vmatpush.msra.mxu0 0.0
  %901 = vmatpush.msra.mxu0 0.0
  %902 = vmatpush.msra.mxu0 0.0
  %903 = vmatpush.msra.mxu0 0.0
  %904 = vmatpush.msra.mxu0 0.0
  %905 = vmatpush.msra.mxu0 0.0
  %906 = vmatpush.msra.mxu0 0.0
  %907 = vmatpush.msra.mxu0 %v16
  %908 = vmatpush.msra.mxu0 %v15
  %909 = vmatpush.msra.mxu0 %v14
  %910 = vmatpush.msra.mxu0 %v13
  %911 = vmatmul.f32.gmra.mxu0 %v891
  %v912 = vpop.f32.mrf.mxu0
  %v913 = vadd.f32 0.0, %v912
  %914 = vmatmul.f32.gmra.mxu0 %v893
  %v915 = vpop.f32.mrf.mxu0
  %v916 = vadd.f32 0.0, %v915
  %917 = vdwg.mxu0
  %v918 = vadd.f32 %v199, %v913
  %v919 = vadd.f32 %v202, %v916
  %v920 = vtanh.pop %v918
  %v921 = vtanh.pop %v919
  %v922 = vmul.f32 %v920, 0.5
  %v923 = vmul.f32 %v921, 0.5
  %v924 = vadd.f32 %v922, 0.5
  %v925 = vadd.f32 %v923, 0.5
  %v926 = vmul.f32 %v924, %v871
  %v927 = vmul.f32 %v925, %v872
  %930 = vrot.lane.b32.xlu0 %v920, 32
  %v931 = vpop.permute.xlu0 %930
  %932 = vrot.lane.b32.xlu0 %v921, 32
  %v933 = vpop.permute.xlu0 %932
  %v936 = vmul.f32 %v924, %v931
  %v937 = vmul.f32 %v925, %v933
  %940 = vrot.lane.b32.xlu0 %v936, 32
  %v941 = vpop.permute.xlu0 %940
  %942 = vrot.lane.b32.xlu0 %v937, 32
  %v943 = vpop.permute.xlu0 %942
  %v946 = vadd.f32 %v926, %v941
  %v947 = vadd.f32 %v927, %v943
  %v948 = vtanh.pop %v946
  %v949 = vtanh.pop %v947
  %952 = vrot.lane.b32.xlu0 %v948, 32
  %v953 = vpop.permute.xlu0 %952
  %954 = vrot.lane.b32.xlu0 %v949, 32
  %v955 = vpop.permute.xlu0 %954
  %v958 = vmul.f32 %v924, %v953
  %v959 = vmul.f32 %v925, %v955
  %962 = vrot.lane.b32.xlu0 %v958, 64
  %v963 = vpop.permute.xlu0 %962
  %964 = vrot.lane.b32.xlu0 %v959, 64
  %v965 = vpop.permute.xlu0 %964
  %v966 = vsel %vm216, %v963, 0
  %v968 = vsel %vm216, %v965, 0
  %970 = vmatpush.msra.mxu0 0.0
  %971 = vmatpush.msra.mxu0 0.0
  %972 = vmatpush.msra.mxu0 0.0
  %973 = vmatpush.msra.mxu0 0.0
  %974 = vmatpush.msra.mxu0 0.0
  %975 = vmatpush.msra.mxu0 0.0
  %976 = vmatpush.msra.mxu0 0.0
  %977 = vmatpush.msra.mxu0 0.0
  %978 = vmatpush.msra.mxu0 0.0
  %979 = vmatpush.msra.mxu0 0.0
  %980 = vmatpush.msra.mxu0 0.0
  %981 = vmatpush.msra.mxu0 0.0
  %982 = vmatpush.msra.mxu0 %v16
  %983 = vmatpush.msra.mxu0 %v15
  %984 = vmatpush.msra.mxu0 %v14
  %985 = vmatpush.msra.mxu0 %v13
  %986 = vmatmul.f32.gmra.mxu0 %v966
  %v987 = vpop.f32.mrf.mxu0
  %v988 = vadd.f32 0.0, %v987
  %989 = vmatmul.f32.gmra.mxu0 %v968
  %v990 = vpop.f32.mrf.mxu0
  %v991 = vadd.f32 0.0, %v990
  %992 = vdwg.mxu0
  %v993 = vadd.f32 %v205, %v988
  %v994 = vadd.f32 %v208, %v991
  %v995 = vtanh.pop %v993
  %v996 = vtanh.pop %v994
  %v997 = vmul.f32 %v995, 0.5
  %v998 = vmul.f32 %v996, 0.5
  %v999 = vadd.f32 %v997, 0.5
  %v1000 = vadd.f32 %v998, 0.5
  %v1001 = vmul.f32 %v999, %v946
  %v1002 = vmul.f32 %v1000, %v947
  %1005 = vrot.lane.b32.xlu0 %v995, 32
  %v1006 = vpop.permute.xlu0 %1005
  %1007 = vrot.lane.b32.xlu0 %v996, 32
  %v1008 = vpop.permute.xlu0 %1007
  %v1011 = vmul.f32 %v999, %v1006
  %v1012 = vmul.f32 %v1000, %v1008
  %1015 = vrot.lane.b32.xlu0 %v1011, 32
  %v1016 = vpop.permute.xlu0 %1015
  %1017 = vrot.lane.b32.xlu0 %v1012, 32
  %v1018 = vpop.permute.xlu0 %1017
  %v1021 = vadd.f32 %v1001, %v1016
  %v1022 = vadd.f32 %v1002, %v1018
  %v1023 = vtanh.pop %v1021
  %v1024 = vtanh.pop %v1022
  %1027 = vrot.lane.b32.xlu0 %v1023, 32
  %v1028 = vpop.permute.xlu0 %1027
  %1029 = vrot.lane.b32.xlu0 %v1024, 32
  %v1030 = vpop.permute.xlu0 %1029
  %v1033 = vmul.f32 %v999, %v1028
  %v1034 = vmul.f32 %v1000, %v1030
  %1037 = vrot.lane.b32.xlu0 %v1033, 64
  %v1038 = vpop.permute.xlu0 %1037
  %1039 = vrot.lane.b32.xlu0 %v1034, 64
  %v1040 = vpop.permute.xlu0 %1039
  %v1041 = vsel %vm216, %v1038, 0
  %v1043 = vsel %vm216, %v1040, 0
  %1045 = vmatpush.msra.mxu0 0.0
  %1046 = vmatpush.msra.mxu0 0.0
  %1047 = vmatpush.msra.mxu0 0.0
  %1048 = vmatpush.msra.mxu0 0.0
  %1049 = vmatpush.msra.mxu0 0.0
  %1050 = vmatpush.msra.mxu0 0.0
  %1051 = vmatpush.msra.mxu0 0.0
  %1052 = vmatpush.msra.mxu0 0.0
  %1053 = vmatpush.msra.mxu0 0.0
  %1054 = vmatpush.msra.mxu0 0.0
  %1055 = vmatpush.msra.mxu0 0.0
  %1056 = vmatpush.msra.mxu0 0.0
  %1057 = vmatpush.msra.mxu0 %v16
  %1058 = vmatpush.msra.mxu0 %v15
  %1059 = vmatpush.msra.mxu0 %v14
  %1060 = vmatpush.msra.mxu0 %v13
  %1061 = vmatmul.f32.gmra.mxu0 %v1041
  %v1062 = vpop.f32.mrf.mxu0
  %v1063 = vadd.f32 0.0, %v1062
  %1064 = vmatmul.f32.gmra.mxu0 %v1043
  %v1065 = vpop.f32.mrf.mxu0
  %v1066 = vadd.f32 0.0, %v1065
  %1067 = vdwg.mxu0
  %v1068 = vadd.f32 %v211, %v1063
  %v1069 = vadd.f32 %v214, %v1066
  %v1070 = vtanh.pop %v1068
  %v1071 = vtanh.pop %v1069
  %v1072 = vmul.f32 %v1070, 0.5
  %v1073 = vmul.f32 %v1071, 0.5
  %v1074 = vadd.f32 %v1072, 0.5
  %v1075 = vadd.f32 %v1073, 0.5
  %v1076 = vmul.f32 %v1074, %v1021
  %v1077 = vmul.f32 %v1075, %v1022
  %1080 = vrot.lane.b32.xlu0 %v1070, 32
  %v1081 = vpop.permute.xlu0 %1080
  %1082 = vrot.lane.b32.xlu0 %v1071, 32
  %v1083 = vpop.permute.xlu0 %1082
  %v1086 = vmul.f32 %v1074, %v1081
  %v1087 = vmul.f32 %v1075, %v1083
  %1090 = vrot.lane.b32.xlu0 %v1086, 32
  %v1091 = vpop.permute.xlu0 %1090
  %1092 = vrot.lane.b32.xlu0 %v1087, 32
  %v1093 = vpop.permute.xlu0 %1092
  %v1096 = vadd.f32 %v1076, %v1091
  %v1097 = vadd.f32 %v1077, %v1093
  %v1098 = vtanh.pop %v1096
  %v1099 = vtanh.pop %v1097
  %1102 = vrot.lane.b32.xlu0 %v1098, 32
  %v1103 = vpop.permute.xlu0 %1102
  %1104 = vrot.lane.b32.xlu0 %v1099, 32
  %v1105 = vpop.permute.xlu0 %1104
  %v1108 = vmul.f32 %v1074, %v1103
  %v1109 = vmul.f32 %v1075, %v1105
  %v1110 = vperm.slane %v26, 0
  %1113 = vrot.lane.b32.xlu0 %v1108, 64
  %v1114 = vpop.permute.xlu0 %1113
  %1115 = vrot.lane.b32.xlu0 %v1109, 64
  %v1116 = vpop.permute.xlu0 %1115
  %v1117 = vsel %vm216, %v1114, 0
  %v1119 = vsel %vm216, %v1116, 0
  %1121 = vmatpush.msra.mxu0 0.0
  %1122 = vmatpush.msra.mxu0 0.0
  %1123 = vmatpush.msra.mxu0 0.0
  %1124 = vmatpush.msra.mxu0 0.0
  %1125 = vmatpush.msra.mxu0 0.0
  %1126 = vmatpush.msra.mxu0 0.0
  %1127 = vmatpush.msra.mxu0 0.0
  %1128 = vmatpush.msra.mxu0 0.0
  %1129 = vmatpush.msra.mxu0 0.0
  %1130 = vmatpush.msra.mxu0 0.0
  %1131 = vmatpush.msra.mxu0 0.0
  %1132 = vmatpush.msra.mxu0 0.0
  %1133 = vmatpush.msra.mxu0 %v20
  %1134 = vmatpush.msra.mxu0 %v19
  %1135 = vmatpush.msra.mxu0 %v18
  %1136 = vmatpush.msra.mxu0 %v17
  %1137 = vmatmul.f32.gmra.mxu0 %v1117
  %v1138 = vpop.f32.mrf.mxu0
  %v1139 = vadd.f32 %v1110, %v1138
  %1140 = vmatmul.f32.gmra.mxu0 %v1119
  %v1141 = vpop.f32.mrf.mxu0
  %v1142 = vadd.f32 %v1110, %v1141
  %1143 = vdwg.mxu0
  %1144 = vmatpush.msra.mxu0 0.0
  %1145 = vmatpush.msra.mxu0 0.0
  %1146 = vmatpush.msra.mxu0 0.0
  %1147 = vmatpush.msra.mxu0 0.0
  %1148 = vmatpush.msra.mxu0 0.0
  %1149 = vmatpush.msra.mxu0 0.0
  %1150 = vmatpush.msra.mxu0 0.0
  %1151 = vmatpush.msra.mxu0 0.0
  %1152 = vmatpush.msra.mxu0 0.0
  %1153 = vmatpush.msra.mxu0 0.0
  %1154 = vmatpush.msra.mxu0 0.0
  %1155 = vmatpush.msra.mxu0 0.0
  %1156 = vmatpush.msra.mxu0 %v24
  %1157 = vmatpush.msra.mxu0 %v23
  %1158 = vmatpush.msra.mxu0 %v22
  %1159 = vmatpush.msra.mxu0 %v21
  %1160 = vmatmul.f32.gmra.mxu0 %v218
  %v1161 = vpop.f32.mrf.mxu0
  %v1162 = vadd.f32 0.0, %v1161
  %1163 = vdwg.mxu0
  %v1164 = vadd.f32 %v1139, %v1162
  %v1165 = vtanh.pop %v1164
  %v1166 = vmul.f32 %v1165, 0.5
  %v1167 = vadd.f32 %v1166, 0.5
  %v1168 = vmul.f32 %v1167, 0.0
  %1170 = vrot.lane.b32.xlu0 %v1165, 32
  %v1171 = vpop.permute.xlu0 %1170
  %v1173 = vmul.f32 %v1167, %v1171
  %1175 = vrot.lane.b32.xlu0 %v1173, 32
  %v1176 = vpop.permute.xlu0 %1175
  %v1178 = vadd.f32 %v1168, %v1176
  %v1179 = vtanh.pop %v1178
  %1181 = vrot.lane.b32.xlu0 %v1179, 32
  %v1182 = vpop.permute.xlu0 %1181
  %v1184 = vmul.f32 %v1167, %v1182
  %1186 = vrot.lane.b32.xlu0 %v1184, 64
  %v1187 = vpop.permute.xlu0 %1186
  %v1188 = vsel %vm216, %v1187, 0
  %1190 = vmatpush.msra.mxu0 0.0
  %1191 = vmatpush.msra.mxu0 0.0
  %1192 = vmatpush.msra.mxu0 0.0
  %1193 = vmatpush.msra.mxu0 0.0
  %1194 = vmatpush.msra.mxu0 0.0
  %1195 = vmatpush.msra.mxu0 0.0
  %1196 = vmatpush.msra.mxu0 0.0
  %1197 = vmatpush.msra.mxu0 0.0
  %1198 = vmatpush.msra.mxu0 0.0
  %1199 = vmatpush.msra.mxu0 0.0
  %1200 = vmatpush.msra.mxu0 0.0
  %1201 = vmatpush.msra.mxu0 0.0
  %1202 = vmatpush.msra.mxu0 %v24
  %1203 = vmatpush.msra.mxu0 %v23
  %1204 = vmatpush.msra.mxu0 %v22
  %1205 = vmatpush.msra.mxu0 %v21
  %1206 = vmatmul.f32.gmra.mxu0 %v1188
  %v1207 = vpop.f32.mrf.mxu0
  %v1208 = vadd.f32 0.0, %v1207
  %1209 = vdwg.mxu0
  %v1211 = vrot.slane %v1208, 6
  %v1213 = vadd.f32 %v1139, %v1211
  %v1214 = vtanh.pop %v1213
  %v1215 = vmul.f32 %v1214, 0.5
  %v1216 = vadd.f32 %v1215, 0.5
  %v1218 = vrot.slane %v1178, 6
  %v1220 = vmul.f32 %v1216, %v1218
  %1222 = vrot.lane.b32.xlu0 %v1214, 32
  %v1223 = vpop.permute.xlu0 %1222
  %v1225 = vmul.f32 %v1216, %v1223
  %1227 = vrot.lane.b32.xlu0 %v1225, 32
  %v1228 = vpop.permute.xlu0 %1227
  %v1230 = vadd.f32 %v1220, %v1228
  %v1231 = vtanh.pop %v1230
  %1233 = vrot.lane.b32.xlu0 %v1231, 32
  %v1234 = vpop.permute.xlu0 %1233
  %v1236 = vmul.f32 %v1216, %v1234
  %v1238 = vrot.slane %v1236, 2
  %1239 = vrot.lane.b32.xlu0 %v1238, 64
  %v1240 = vpop.permute.xlu0 %1239
  %v1241 = vsel %vm216, %v1240, 0
  %1243 = vmatpush.msra.mxu0 0.0
  %1244 = vmatpush.msra.mxu0 0.0
  %1245 = vmatpush.msra.mxu0 0.0
  %1246 = vmatpush.msra.mxu0 0.0
  %1247 = vmatpush.msra.mxu0 0.0
  %1248 = vmatpush.msra.mxu0 0.0
  %1249 = vmatpush.msra.mxu0 0.0
  %1250 = vmatpush.msra.mxu0 0.0
  %1251 = vmatpush.msra.mxu0 0.0
  %1252 = vmatpush.msra.mxu0 0.0
  %1253 = vmatpush.msra.mxu0 0.0
  %1254 = vmatpush.msra.mxu0 0.0
  %1255 = vmatpush.msra.mxu0 %v24
  %1256 = vmatpush.msra.mxu0 %v23
  %1257 = vmatpush.msra.mxu0 %v22
  %1258 = vmatpush.msra.mxu0 %v21
  %1259 = vmatmul.f32.gmra.mxu0 %v1241
  %v1260 = vpop.f32.mrf.mxu0
  %v1261 = vadd.f32 0.0, %v1260
  %1262 = vdwg.mxu0
  %v1264 = vrot.slane %v1261, 4
  %v1266 = vadd.f32 %v1139, %v1264
  %v1267 = vtanh.pop %v1266
  %v1268 = vmul.f32 %v1267, 0.5
  %v1269 = vadd.f32 %v1268, 0.5
  %v1271 = vrot.slane %v1230, 6
  %v1273 = vmul.f32 %v1269, %v1271
  %1275 = vrot.lane.b32.xlu0 %v1267, 32
  %v1276 = vpop.permute.xlu0 %1275
  %v1278 = vmul.f32 %v1269, %v1276
  %1280 = vrot.lane.b32.xlu0 %v1278, 32
  %v1281 = vpop.permute.xlu0 %1280
  %v1283 = vadd.f32 %v1273, %v1281
  %v1284 = vtanh.pop %v1283
  %1286 = vrot.lane.b32.xlu0 %v1284, 32
  %v1287 = vpop.permute.xlu0 %1286
  %v1289 = vmul.f32 %v1269, %v1287
  %v1291 = vrot.slane %v1289, 4
  %1292 = vrot.lane.b32.xlu0 %v1291, 64
  %v1293 = vpop.permute.xlu0 %1292
  %v1294 = vsel %vm216, %v1293, 0
  %1296 = vmatpush.msra.mxu0 0.0
  %1297 = vmatpush.msra.mxu0 0.0
  %1298 = vmatpush.msra.mxu0 0.0
  %1299 = vmatpush.msra.mxu0 0.0
  %1300 = vmatpush.msra.mxu0 0.0
  %1301 = vmatpush.msra.mxu0 0.0
  %1302 = vmatpush.msra.mxu0 0.0
  %1303 = vmatpush.msra.mxu0 0.0
  %1304 = vmatpush.msra.mxu0 0.0
  %1305 = vmatpush.msra.mxu0 0.0
  %1306 = vmatpush.msra.mxu0 0.0
  %1307 = vmatpush.msra.mxu0 0.0
  %1308 = vmatpush.msra.mxu0 %v24
  %1309 = vmatpush.msra.mxu0 %v23
  %1310 = vmatpush.msra.mxu0 %v22
  %1311 = vmatpush.msra.mxu0 %v21
  %1312 = vmatmul.f32.gmra.mxu0 %v1294
  %v1313 = vpop.f32.mrf.mxu0
  %v1314 = vadd.f32 0.0, %v1313
  %1315 = vdwg.mxu0
  %v1317 = vrot.slane %v1314, 2
  %v1319 = vadd.f32 %v1139, %v1317
  %v1320 = vtanh.pop %v1319
  %v1321 = vmul.f32 %v1320, 0.5
  %v1322 = vadd.f32 %v1321, 0.5
  %v1324 = vrot.slane %v1283, 6
  %v1326 = vmul.f32 %v1322, %v1324
  %1328 = vrot.lane.b32.xlu0 %v1320, 32
  %v1329 = vpop.permute.xlu0 %1328
  %v1331 = vmul.f32 %v1322, %v1329
  %1333 = vrot.lane.b32.xlu0 %v1331, 32
  %v1334 = vpop.permute.xlu0 %1333
  %v1336 = vadd.f32 %v1326, %v1334
  %v1337 = vtanh.pop %v1336
  %1339 = vrot.lane.b32.xlu0 %v1337, 32
  %v1340 = vpop.permute.xlu0 %1339
  %v1342 = vmul.f32 %v1322, %v1340
  %v1344 = vrot.slane %v1342, 6
  %1345 = vrot.lane.b32.xlu0 %v1344, 64
  %v1346 = vpop.permute.xlu0 %1345
  %v1347 = vsel %vm216, %v1346, 0
  %1349 = vmatpush.msra.mxu0 0.0
  %1350 = vmatpush.msra.mxu0 0.0
  %1351 = vmatpush.msra.mxu0 0.0
  %1352 = vmatpush.msra.mxu0 0.0
  %1353 = vmatpush.msra.mxu0 0.0
  %1354 = vmatpush.msra.mxu0 0.0
  %1355 = vmatpush.msra.mxu0 0.0
  %1356 = vmatpush.msra.mxu0 0.0
  %1357 = vmatpush.msra.mxu0 0.0
  %1358 = vmatpush.msra.mxu0 0.0
  %1359 = vmatpush.msra.mxu0 0.0
  %1360 = vmatpush.msra.mxu0 0.0
  %1361 = vmatpush.msra.mxu0 %v24
  %1362 = vmatpush.msra.mxu0 %v23
  %1363 = vmatpush.msra.mxu0 %v22
  %1364 = vmatpush.msra.mxu0 %v21
  %1365 = vmatmul.f32.gmra.mxu0 %v1347
  %v1366 = vpop.f32.mrf.mxu0
  %v1367 = vadd.f32 0.0, %v1366
  %1368 = vdwg.mxu0
  %v1369 = vadd.f32 %v1142, %v1367
  %v1370 = vtanh.pop %v1369
  %v1371 = vmul.f32 %v1370, 0.5
  %v1372 = vadd.f32 %v1371, 0.5
  %v1374 = vrot.slane %v1336, 6
  %v1376 = vmul.f32 %v1372, %v1374
  %1378 = vrot.lane.b32.xlu0 %v1370, 32
  %v1379 = vpop.permute.xlu0 %1378
  %v1381 = vmul.f32 %v1372, %v1379
  %1383 = vrot.lane.b32.xlu0 %v1381, 32
  %v1384 = vpop.permute.xlu0 %1383
  %v1386 = vadd.f32 %v1376, %v1384
  %v1387 = vtanh.pop %v1386
  %1389 = vrot.lane.b32.xlu0 %v1387, 32
  %v1390 = vpop.permute.xlu0 %1389
  %v1392 = vmul.f32 %v1372, %v1390
  %1394 = vrot.lane.b32.xlu0 %v1392, 64
  %v1395 = vpop.permute.xlu0 %1394
  %v1396 = vsel %vm216, %v1395, 0
  %1398 = vmatpush.msra.mxu0 0.0
  %1399 = vmatpush.msra.mxu0 0.0
  %1400 = vmatpush.msra.mxu0 0.0
  %1401 = vmatpush.msra.mxu0 0.0
  %1402 = vmatpush.msra.mxu0 0.0
  %1403 = vmatpush.msra.mxu0 0.0
  %1404 = vmatpush.msra.mxu0 0.0
  %1405 = vmatpush.msra.mxu0 0.0
  %1406 = vmatpush.msra.mxu0 0.0
  %1407 = vmatpush.msra.mxu0 0.0
  %1408 = vmatpush.msra.mxu0 0.0
  %1409 = vmatpush.msra.mxu0 0.0
  %1410 = vmatpush.msra.mxu0 %v24
  %1411 = vmatpush.msra.mxu0 %v23
  %1412 = vmatpush.msra.mxu0 %v22
  %1413 = vmatpush.msra.mxu0 %v21
  %1414 = vmatmul.f32.gmra.mxu0 %v1396
  %v1415 = vpop.f32.mrf.mxu0
  %v1416 = vadd.f32 0.0, %v1415
  %1417 = vdwg.mxu0
  %v1419 = vrot.slane %v1416, 6
  %v1421 = vadd.f32 %v1142, %v1419
  %v1422 = vtanh.pop %v1421
  %v1423 = vmul.f32 %v1422, 0.5
  %v1424 = vadd.f32 %v1423, 0.5
  %v1426 = vrot.slane %v1386, 6
  %v1428 = vmul.f32 %v1424, %v1426
  %1430 = vrot.lane.b32.xlu0 %v1422, 32
  %v1431 = vpop.permute.xlu0 %1430
  %v1433 = vmul.f32 %v1424, %v1431
  %1435 = vrot.lane.b32.xlu0 %v1433, 32
  %v1436 = vpop.permute.xlu0 %1435
  %v1438 = vadd.f32 %v1428, %v1436
  %v1439 = vtanh.pop %v1438
  %1441 = vrot.lane.b32.xlu0 %v1439, 32
  %v1442 = vpop.permute.xlu0 %1441
  %v1444 = vmul.f32 %v1424, %v1442
  %v1446 = vrot.slane %v1444, 2
  %1447 = vrot.lane.b32.xlu0 %v1446, 64
  %v1448 = vpop.permute.xlu0 %1447
  %v1449 = vsel %vm216, %v1448, 0
  %1451 = vmatpush.msra.mxu0 0.0
  %1452 = vmatpush.msra.mxu0 0.0
  %1453 = vmatpush.msra.mxu0 0.0
  %1454 = vmatpush.msra.mxu0 0.0
  %1455 = vmatpush.msra.mxu0 0.0
  %1456 = vmatpush.msra.mxu0 0.0
  %1457 = vmatpush.msra.mxu0 0.0
  %1458 = vmatpush.msra.mxu0 0.0
  %1459 = vmatpush.msra.mxu0 0.0
  %1460 = vmatpush.msra.mxu0 0.0
  %1461 = vmatpush.msra.mxu0 0.0
  %1462 = vmatpush.msra.mxu0 0.0
  %1463 = vmatpush.msra.mxu0 %v24
  %1464 = vmatpush.msra.mxu0 %v23
  %1465 = vmatpush.msra.mxu0 %v22
  %1466 = vmatpush.msra.mxu0 %v21
  %1467 = vmatmul.f32.gmra.mxu0 %v1449
  %v1468 = vpop.f32.mrf.mxu0
  %v1469 = vadd.f32 0.0, %v1468
  %1470 = vdwg.mxu0
  %v1472 = vrot.slane %v1469, 4
  %v1474 = vadd.f32 %v1142, %v1472
  %v1475 = vtanh.pop %v1474
  %v1476 = vmul.f32 %v1475, 0.5
  %v1477 = vadd.f32 %v1476, 0.5
  %v1479 = vrot.slane %v1438, 6
  %v1481 = vmul.f32 %v1477, %v1479
  %1483 = vrot.lane.b32.xlu0 %v1475, 32
  %v1484 = vpop.permute.xlu0 %1483
  %v1486 = vmul.f32 %v1477, %v1484
  %1488 = vrot.lane.b32.xlu0 %v1486, 32
  %v1489 = vpop.permute.xlu0 %1488
  %v1491 = vadd.f32 %v1481, %v1489
  %v1492 = vtanh.pop %v1491
  %1494 = vrot.lane.b32.xlu0 %v1492, 32
  %v1495 = vpop.permute.xlu0 %1494
  %v1497 = vmul.f32 %v1477, %v1495
  %v1499 = vrot.slane %v1497, 4
  %1500 = vrot.lane.b32.xlu0 %v1499, 64
  %v1501 = vpop.permute.xlu0 %1500
  %v1502 = vsel %vm216, %v1501, 0
  %1504 = vmatpush.msra.mxu0 0.0
  %1505 = vmatpush.msra.mxu0 0.0
  %1506 = vmatpush.msra.mxu0 0.0
  %1507 = vmatpush.msra.mxu0 0.0
  %1508 = vmatpush.msra.mxu0 0.0
  %1509 = vmatpush.msra.mxu0 0.0
  %1510 = vmatpush.msra.mxu0 0.0
  %1511 = vmatpush.msra.mxu0 0.0
  %1512 = vmatpush.msra.mxu0 0.0
  %1513 = vmatpush.msra.mxu0 0.0
  %1514 = vmatpush.msra.mxu0 0.0
  %1515 = vmatpush.msra.mxu0 0.0
  %1516 = vmatpush.msra.mxu0 %v24
  %1517 = vmatpush.msra.mxu0 %v23
  %1518 = vmatpush.msra.mxu0 %v22
  %1519 = vmatpush.msra.mxu0 %v21
  %1520 = vmatmul.f32.gmra.mxu0 %v1502
  %v1521 = vpop.f32.mrf.mxu0
  %v1522 = vadd.f32 0.0, %v1521
  %1523 = vdwg.mxu0
  %v1525 = vrot.slane %v1522, 2
  %v1527 = vadd.f32 %v1142, %v1525
  %v1528 = vtanh.pop %v1527
  %v1529 = vmul.f32 %v1528, 0.5
  %v1530 = vadd.f32 %v1529, 0.5
  %v1532 = vrot.slane %v1491, 6
  %v1534 = vmul.f32 %v1530, %v1532
  %1536 = vrot.lane.b32.xlu0 %v1528, 32
  %v1537 = vpop.permute.xlu0 %1536
  %v1539 = vmul.f32 %v1530, %v1537
  %1541 = vrot.lane.b32.xlu0 %v1539, 32
  %v1542 = vpop.permute.xlu0 %1541
  %v1544 = vadd.f32 %v1534, %v1542
  %v1545 = vtanh.pop %v1544
  %1547 = vrot.lane.b32.xlu0 %v1545, 32
  %v1548 = vpop.permute.xlu0 %1547
  %v1550 = vmul.f32 %v1530, %v1548
  %v1551 = vperm.slane %v27, 0
  %1553 = vrot.lane.b32.xlu0 %v1551, 64
  %v1554 = vpop.permute.xlu0 %1553
  %v1556 = vmul.f32 %v1550, %v1554
  %1558 = vrot.lane.b32.xlu0 %v1556, 64
  %v1559 = vpop.permute.xlu0 %1558
  %vm1561 = vcmask 261126
  %v1562 = vsel %vm1561, %v1559, 0.0
  %1563 = vadd.xlane.f32.xlu0 %v1562
  %v1564 = vpop.xlane.xlu0 %1563
  %v1565 = vperm.slane %v28, 0
  %v1566 = vadd.f32 %v1564, %v1565
  %v1567 = vmul.f32 %v1566, 0.5
  %v1568 = vtanh.pop %v1567
  %v1569 = vmul.f32 %v1568, 0.5
  %v1570 = vadd.f32 %v1569, 0.5
  %vm1571 = vcmask 7174
  %1572 = vst.msk [vmem:[%s2 - $0x6] sm:$0xc0] %vm1571, %v1570
  // Predicated region
  $region10: #{lstm_discriminator_forward.1} parent=0 // pred_check
    _
  $region11: #{lstm_discriminator_forward.1} parent=0 // pred_check_branch
    %1574 = sbr.rel (0) target = $region13
  $region12: #{lstm_discriminator_forward.1} parent=0 // pred_region
    _
  $region13: #{lstm_discriminator_forward.1} parent=0 // pred_fallthru
    _
  // Predicated region
  $region14: #{lstm_discriminator_forward.1} parent=0 // pred_check
    _
  $region15: #{lstm_discriminator_forward.1} parent=0 // pred_check_branch
    %1576 = sbr.rel (0) target = $region17
  $region16: #{lstm_discriminator_forward.1} parent=0 // pred_region
    _
  $region17: #{lstm_discriminator_forward.1} parent=0 // pred_fallthru
    _

</llo_original>
